<compile_context>
chip_gen: v7x
topology: tpu7x:2x2x1
jax: 0.10.0
libtpu: 0.0.40
codegen_flags: <defaults>
</compile_context>

<pallas_src>
import math
import jax
import jax.numpy as jnp
from jax import lax
from jax.experimental import pallas as pl
from jax.experimental.pallas import tpu as pltpu

# ---------------- hyper-parameters (small, deterministic) ----------------
B = 2            # batch
T = 8            # sequence length
BT = B * T
H = 32           # xlent_hidden_dim
N_HEAD = 4
D_HEAD = H // N_HEAD
D_INNER = 64
N_LAYER = 2
VOCAB = 64
N_CLASSES = 2    # len(hparams.output_classes)
PAD_IDX = 0
LN_EPS = 1e-12
H2 = H // 2      # classifier hidden width
C_PAD = 128      # lane-dense width for the final classifier output slab
MISC_ROWS = BT + 8   # rows 0:BT attn bias, row BT cls bias1, row BT+1 cls bias2


# ---------------- in-kernel helpers (f32 elementwise, bf16 MXU) ----------------
def _gelu(x):
    # tanh-approx GELU; f32 elementwise on all gens (v5e has no bf16 VPU/EUP).
    c = math.sqrt(2.0 / math.pi)
    return 0.5 * x * (1.0 + jnp.tanh(c * (x + 0.044715 * x * x * x)))


def _layernorm(x, g, b):
    mu = jnp.mean(x, axis=-1, keepdims=True)
    var = jnp.mean((x - mu) * (x - mu), axis=-1, keepdims=True)
    return (x - mu) * lax.rsqrt(var + LN_EPS) * g + b


def _mm(a_f32, w_bf16):
    # Activations cast to bf16, weights already bf16 in HBM, f32 accumulation.
    return jnp.dot(a_f32.astype(jnp.bfloat16), w_bf16,
                   preferred_element_type=jnp.float32)


# ---------------- single fused kernel: backbone + classifier ----------------
def xlnet_fused_kernel(x_ref, misc_ref, wqkv_ref, wo_ref, w1_ref, w2_ref,
                       vec_ref, cw1_ref, cw2_ref, out_ref, s_scr):
    scale = 1.0 / math.sqrt(D_HEAD)
    xf = x_ref[...]                        # (BT, H) f32, VMEM-resident
    misc = misc_ref[...]                   # (24, 128) f32 packed slab
    bias = misc[0:BT, 0:BT]                # additive bias: 0 valid same-batch key, -1e9 otherwise
    cb1 = misc[BT:BT + 1, 0:H2]            # (1, 16) classifier bias 1
    cb2 = misc[BT + 1:BT + 2, :]           # (1, 128) classifier bias 2 (lane-dense)

    for l in range(N_LAYER):               # static unroll over layers
        wqkv = wqkv_ref[l]                 # (H, 3H)  bf16 fused Q|K|V projection
        wo_l = wo_ref[l]                   # (N_HEAD, D_HEAD, H) bf16 per-head output proj
        w1 = w1_ref[l]                     # (H, D_INNER) bf16
        w2 = w2_ref[l]                     # (D_INNER, H) bf16
        vecs = vec_ref[l]                  # (8, D_INNER) f32 packed vectors
        ln1g = vecs[0:1, :H]
        ln1b = vecs[1:2, :H]
        b1 = vecs[2:3, :]                  # (1, D_INNER)
        b2 = vecs[3:4, :H]
        ln2g = vecs[4:5, :H]
        ln2b = vecs[5:6, :H]

        qkv = _mm(xf, wqkv)                # (BT, 3H) f32: one full-width matmul
        q = qkv[:, 0:H]
        k = qkv[:, H:2 * H]
        v = qkv[:, 2 * H:3 * H]

        # --- per-head scores into one (N_HEAD*BT, BT) scratch slab ---
        for h in range(N_HEAD):            # static unroll; (16,16) score per head
            qh = q[:, h * D_HEAD:(h + 1) * D_HEAD].astype(jnp.bfloat16)
            kh = k[:, h * D_HEAD:(h + 1) * D_HEAD].astype(jnp.bfloat16)
            s = lax.dot_general(qh, kh, (((1,), (1,)), ((), ())),
                                preferred_element_type=jnp.float32) * scale
            s_scr[h * BT:(h + 1) * BT, :] = s + bias   # sublane-aligned row write

        # --- ONE batched softmax over every (batch, head) ---
        s_all = s_scr[...]                                     # (64, 16)
        m = jnp.max(s_all, axis=-1, keepdims=True)
        p_all = jnp.exp(s_all - m)
        p_all = p_all * pl.reciprocal(jnp.sum(p_all, axis=-1, keepdims=True),
                                      approx=True)

        # --- context + output projection folded into the head loop ---
        attn_out = None
        for h in range(N_HEAD):
            ph = p_all[h * BT:(h + 1) * BT, :].astype(jnp.bfloat16)   # (BT, BT)
            vh = v[:, h * D_HEAD:(h + 1) * D_HEAD].astype(jnp.bfloat16)
            ctx = jnp.dot(ph, vh, preferred_element_type=jnp.float32)  # (BT, D_HEAD)
            contrib = _mm(ctx, wo_l[h])                                # (BT, H)
            attn_out = contrib if attn_out is None else attn_out + contrib

        h1 = _layernorm(xf + attn_out, ln1g, ln1b)
        ff = _gelu(_mm(h1, w1) + b1)
        ff = _mm(ff, w2) + b2
        xf = _layernorm(h1 + ff, ln2g, ln2b)

    # classification head: Linear(H, H/2) -> Tanh -> Linear(H/2, C)
    # (dropouts are identity in eval mode); final store is lane-dense (BT, 128).
    hid = jnp.tanh(_mm(xf, cw1_ref[...]) + cb1)        # (BT, 16) f32
    out_ref[...] = _mm(hid, cw2_ref[...]) + cb2        # (BT, 128)


def run_xlnet_fused(x_flat, misc, p):
    vmem = pltpu.MemorySpace.VMEM
    return pl.pallas_call(
        xlnet_fused_kernel,
        out_shape=jax.ShapeDtypeStruct((BT, C_PAD), jnp.float32),
        in_specs=[pl.BlockSpec(memory_space=vmem)] * 9,
        out_specs=pl.BlockSpec(memory_space=vmem),
        scratch_shapes=[pltpu.VMEM((N_HEAD * BT, BT), jnp.float32)],
    )(x_flat, misc, p["wqkv"], p["wo"], p["w1"], p["w2"], p["vecs"],
      p["cw1"], p["cw2"])


# ---------------- deterministic parameter init (packed, bf16 weights) ----------------
def init_params(key):
    def nrm(k, shp, s=0.02, dtype=jnp.bfloat16):
        return (s * jax.random.normal(k, shp)).astype(dtype)

    keys = iter(jax.random.split(key, 16))

    # packed per-layer vector slab: rows 0 ln1g, 1 ln1b, 2 b1, 3 b2, 4 ln2g, 5 ln2b
    vecs = jnp.zeros((N_LAYER, 8, D_INNER), jnp.float32)
    vecs = vecs.at[:, 0, :H].set(1.0)     # ln1 gamma
    vecs = vecs.at[:, 4, :H].set(1.0)     # ln2 gamma

    # classifier: cw1 un-padded (H, H/2); only cw2 lane-dense for the output store
    cw1 = nrm(next(keys), (H, H2))
    cw2 = jnp.zeros((H2, C_PAD), jnp.bfloat16).at[:, :N_CLASSES].set(
        nrm(next(keys), (H2, N_CLASSES)))

    return {
        "word_emb": nrm(next(keys), (VOCAB, H), dtype=jnp.float32),
        "seg_emb": nrm(next(keys), (2, H), dtype=jnp.float32),
        "wqkv": nrm(next(keys), (N_LAYER, H, 3 * H)),            # bf16, heads fused on cols
        "wo": nrm(next(keys), (N_LAYER, N_HEAD, D_HEAD, H)),     # bf16, per-head slabs
        "w1": nrm(next(keys), (N_LAYER, H, D_INNER)),            # bf16
        "w2": nrm(next(keys), (N_LAYER, D_INNER, H)),            # bf16
        "vecs": vecs,                                            # f32
        "cw1": cw1,                                              # bf16
        "cw2": cw2,                                              # bf16
        "cb": jnp.zeros((2, C_PAD), jnp.float32),                # classifier biases
    }


# ---------------- forward (mirrors XLNetEncoder.forward) ----------------
@jax.jit
def xlnet_forward_core(params, batch_sequence, sequence_lengths):
    # segment_tensors = zeros -> every token gets segment embedding 0
    x = params["word_emb"][batch_sequence] + params["seg_emb"][0][None, None, :]
    x_flat = x.reshape(BT, H).astype(jnp.float32)          # view(-1, hidden)

    # get_mask(batch_sequence, sequence_lengths, pad_idx): valid = pos < length
    pos = jnp.arange(T)[None, :]
    valid = pos < sequence_lengths[:, None]                # (B, T) bool
    key_valid = valid.reshape(-1)                          # (BT,)
    batch_id = jnp.arange(BT) // T
    same_batch = batch_id[:, None] == batch_id[None, :]
    bias = jnp.where(same_batch & key_valid[None, :],
                     0.0, -1e9).astype(jnp.float32)        # (BT, BT)

    # consolidated tiny-input slab: attn bias + classifier biases
    misc = jnp.zeros((MISC_ROWS, C_PAD), jnp.float32)
    misc = misc.at[:BT, :BT].set(bias)
    misc = misc.at[BT:BT + 2, :].set(params["cb"])

    logits_slab = run_xlnet_fused(x_flat, misc, params)    # (BT, 128)
    return logits_slab[:, :N_CLASSES], valid


def xlnet_encoder_forward(params, batch_sequence, sequence_lengths, batch_label):
    logits_all, valid = xlnet_forward_core(params, batch_sequence,
                                           sequence_lengths)
    mask = valid.reshape(-1)                               # (BT,) bool
    # dynamic-shape nonzero gather done eagerly (outside jit), row-wise identical
    logits = logits_all[mask]                              # (n_valid, C)
    labels = batch_label.reshape(-1)[mask] - 1             # (n_valid,)
    return logits, labels


# ---------------- main ----------------
if __name__ == "__main__":
    key = jax.random.PRNGKey(0)
    k_p, k_tok, k_lab = jax.random.split(key, 3)

    params = init_params(k_p)

    sequence_lengths = jnp.array([8, 5], dtype=jnp.int32)
    tokens = jax.random.randint(k_tok, (B, T), 1, VOCAB, dtype=jnp.int32)
    pos = jnp.arange(T)[None, :]
    valid = pos < sequence_lengths[:, None]
    batch_sequence = jnp.where(valid, tokens, PAD_IDX)

    # labels are 1-indexed in the PyTorch module (it subtracts 1)
    batch_label = jax.random.randint(k_lab, (B, T), 1, N_CLASSES + 1,
                                     dtype=jnp.int32)
    batch_label = jnp.where(valid, batch_label, 0)

    logits, labels = xlnet_encoder_forward(
        params, batch_sequence, sequence_lengths, batch_label)

    jax.block_until_ready(logits)
    jax.block_until_ready(labels)

    n_valid = int(sequence_lengths.sum())
    assert logits.shape == (n_valid, N_CLASSES), logits.shape
    assert labels.shape == (n_valid,), labels.shape
    assert bool(jnp.all(jnp.isfinite(logits)))
    print("KERNEL_OK")
</pallas_src>

<mosaic_0001>
module attributes {stable_mosaic.version = 11 : i64} {
  func.func @xlnet_fused_kernel(%arg0: memref<16x32xf32, #tpu.memory_space<vmem>>, %arg1: memref<24x128xf32, #tpu.memory_space<vmem>>, %arg2: memref<2x32x96xbf16, #tpu.memory_space<vmem>>, %arg3: memref<2x4x8x32xbf16, #tpu.memory_space<vmem>>, %arg4: memref<2x32x64xbf16, #tpu.memory_space<vmem>>, %arg5: memref<2x64x32xbf16, #tpu.memory_space<vmem>>, %arg6: memref<2x8x64xf32, #tpu.memory_space<vmem>>, %arg7: memref<32x16xbf16, #tpu.memory_space<vmem>>, %arg8: memref<16x128xbf16, #tpu.memory_space<vmem>>, %arg9: memref<16x128xf32, #tpu.memory_space<vmem>>, %arg10: memref<64x16xf32, #tpu.memory_space<vmem>>) attributes {dimension_semantics = [], scalar_prefetch = 0 : i64, scratch_operands = 1 : i64, tpu.core_type = #tpu.core_type<tc>} {
    %c0 = arith.constant 0 : index
    %c0_0 = arith.constant 0 : index
    %0 = vector.load %arg0[%c0, %c0_0] : memref<16x32xf32, #tpu.memory_space<vmem>>, vector<16x32xf32>
    %c0_1 = arith.constant 0 : index
    %c0_2 = arith.constant 0 : index
    %1 = vector.load %arg1[%c0_1, %c0_2] : memref<24x128xf32, #tpu.memory_space<vmem>>, vector<24x128xf32>
    %2 = vector.extract_strided_slice %1 {offsets = [0, 0], sizes = [16, 16], strides = [1, 1]} : vector<24x128xf32> to vector<16x16xf32>
    %3 = vector.extract_strided_slice %1 {offsets = [16, 0], sizes = [1, 16], strides = [1, 1]} : vector<24x128xf32> to vector<1x16xf32>
    %4 = vector.extract_strided_slice %1 {offsets = [17, 0], sizes = [1, 128], strides = [1, 1]} : vector<24x128xf32> to vector<1x128xf32>
    %c0_3 = arith.constant 0 : index
    %c0_4 = arith.constant 0 : index
    %c0_5 = arith.constant 0 : index
    %5 = vector.load %arg2[%c0_3, %c0_4, %c0_5] : memref<2x32x96xbf16, #tpu.memory_space<vmem>>, vector<1x32x96xbf16>
    %6 = vector.shape_cast %5 : vector<1x32x96xbf16> to vector<32x96xbf16>
    %c0_6 = arith.constant 0 : index
    %c0_7 = arith.constant 0 : index
    %c0_8 = arith.constant 0 : index
    %c0_9 = arith.constant 0 : index
    %7 = vector.load %arg3[%c0_6, %c0_7, %c0_8, %c0_9] : memref<2x4x8x32xbf16, #tpu.memory_space<vmem>>, vector<1x4x8x32xbf16>
    %8 = vector.shape_cast %7 : vector<1x4x8x32xbf16> to vector<4x8x32xbf16>
    %c0_10 = arith.constant 0 : index
    %c0_11 = arith.constant 0 : index
    %c0_12 = arith.constant 0 : index
    %9 = vector.load %arg4[%c0_10, %c0_11, %c0_12] : memref<2x32x64xbf16, #tpu.memory_space<vmem>>, vector<1x32x64xbf16>
    %10 = vector.shape_cast %9 : vector<1x32x64xbf16> to vector<32x64xbf16>
    %c0_13 = arith.constant 0 : index
    %c0_14 = arith.constant 0 : index
    %c0_15 = arith.constant 0 : index
    %11 = vector.load %arg5[%c0_13, %c0_14, %c0_15] : memref<2x64x32xbf16, #tpu.memory_space<vmem>>, vector<1x64x32xbf16>
    %12 = vector.shape_cast %11 : vector<1x64x32xbf16> to vector<64x32xbf16>
    %c0_16 = arith.constant 0 : index
    %c0_17 = arith.constant 0 : index
    %c0_18 = arith.constant 0 : index
    %13 = vector.load %arg6[%c0_16, %c0_17, %c0_18] : memref<2x8x64xf32, #tpu.memory_space<vmem>>, vector<1x8x64xf32>
    %14 = vector.shape_cast %13 : vector<1x8x64xf32> to vector<8x64xf32>
    %15 = vector.extract_strided_slice %14 {offsets = [0, 0], sizes = [1, 32], strides = [1, 1]} : vector<8x64xf32> to vector<1x32xf32>
    %16 = vector.extract_strided_slice %14 {offsets = [1, 0], sizes = [1, 32], strides = [1, 1]} : vector<8x64xf32> to vector<1x32xf32>
    %17 = vector.extract_strided_slice %14 {offsets = [2, 0], sizes = [1, 64], strides = [1, 1]} : vector<8x64xf32> to vector<1x64xf32>
    %18 = vector.extract_strided_slice %14 {offsets = [3, 0], sizes = [1, 32], strides = [1, 1]} : vector<8x64xf32> to vector<1x32xf32>
    %19 = vector.extract_strided_slice %14 {offsets = [4, 0], sizes = [1, 32], strides = [1, 1]} : vector<8x64xf32> to vector<1x32xf32>
    %20 = vector.extract_strided_slice %14 {offsets = [5, 0], sizes = [1, 32], strides = [1, 1]} : vector<8x64xf32> to vector<1x32xf32>
    %21 = arith.truncf %0 : vector<16x32xf32> to vector<16x32xbf16>
    %cst = arith.constant dense<0.000000e+00> : vector<16x96xf32>
    %22 = tpu.matmul %21, %6, %cst {dimension_numbers = #tpu.dot_dimension_numbers<[1], [0], [0], [1], [0, 0, 1, 1], [], []>} : vector<16x32xbf16>, vector<32x96xbf16>, vector<16x96xf32> -> vector<16x96xf32>
    %23 = vector.extract_strided_slice %22 {offsets = [0, 0], sizes = [16, 32], strides = [1, 1]} : vector<16x96xf32> to vector<16x32xf32>
    %24 = vector.extract_strided_slice %22 {offsets = [0, 32], sizes = [16, 32], strides = [1, 1]} : vector<16x96xf32> to vector<16x32xf32>
    %25 = vector.extract_strided_slice %22 {offsets = [0, 64], sizes = [16, 32], strides = [1, 1]} : vector<16x96xf32> to vector<16x32xf32>
    %26 = vector.extract_strided_slice %23 {offsets = [0, 0], sizes = [16, 8], strides = [1, 1]} : vector<16x32xf32> to vector<16x8xf32>
    %27 = arith.truncf %26 : vector<16x8xf32> to vector<16x8xbf16>
    %28 = vector.extract_strided_slice %24 {offsets = [0, 0], sizes = [16, 8], strides = [1, 1]} : vector<16x32xf32> to vector<16x8xf32>
    %29 = arith.truncf %28 : vector<16x8xf32> to vector<16x8xbf16>
    %cst_19 = arith.constant dense<0.000000e+00> : vector<16x16xf32>
    %30 = tpu.matmul %27, %29, %cst_19 {dimension_numbers = #tpu.dot_dimension_numbers<[1], [1], [0], [0], [0, 0, 1, 0], [], []>} : vector<16x8xbf16>, vector<16x8xbf16>, vector<16x16xf32> -> vector<16x16xf32>
    %cst_20 = arith.constant 0.353553385 : f32
    %31 = vector.broadcast %cst_20 : f32 to vector<16x16xf32>
    %32 = arith.mulf %30, %31 : vector<16x16xf32>
    %33 = arith.addf %32, %2 : vector<16x16xf32>
    %c0_21 = arith.constant 0 : index
    %c0_22 = arith.constant 0 : index
    %34 = vector.load %arg10[%c0_21, %c0_22] : memref<64x16xf32, #tpu.memory_space<vmem>>, vector<16x16xf32>
    tpu.vector_store %arg10[%c0_21, %c0_22], %33 {strides = array<i32>} : memref<64x16xf32, #tpu.memory_space<vmem>>, vector<16x16xf32>,
    %35 = vector.extract_strided_slice %23 {offsets = [0, 8], sizes = [16, 8], strides = [1, 1]} : vector<16x32xf32> to vector<16x8xf32>
    %36 = arith.truncf %35 : vector<16x8xf32> to vector<16x8xbf16>
    %37 = vector.extract_strided_slice %24 {offsets = [0, 8], sizes = [16, 8], strides = [1, 1]} : vector<16x32xf32> to vector<16x8xf32>
    %38 = arith.truncf %37 : vector<16x8xf32> to vector<16x8xbf16>
    %cst_23 = arith.constant dense<0.000000e+00> : vector<16x16xf32>
    %39 = tpu.matmul %36, %38, %cst_23 {dimension_numbers = #tpu.dot_dimension_numbers<[1], [1], [0], [0], [0, 0, 1, 0], [], []>} : vector<16x8xbf16>, vector<16x8xbf16>, vector<16x16xf32> -> vector<16x16xf32>
    %cst_24 = arith.constant 0.353553385 : f32
    %40 = vector.broadcast %cst_24 : f32 to vector<16x16xf32>
    %41 = arith.mulf %39, %40 : vector<16x16xf32>
    %42 = arith.addf %41, %2 : vector<16x16xf32>
    %c16 = arith.constant 16 : index
    %c0_25 = arith.constant 0 : index
    %43 = vector.load %arg10[%c16, %c0_25] : memref<64x16xf32, #tpu.memory_space<vmem>>, vector<16x16xf32>
    tpu.vector_store %arg10[%c16, %c0_25], %42 {strides = array<i32>} : memref<64x16xf32, #tpu.memory_space<vmem>>, vector<16x16xf32>,
    %44 = vector.extract_strided_slice %23 {offsets = [0, 16], sizes = [16, 8], strides = [1, 1]} : vector<16x32xf32> to vector<16x8xf32>
    %45 = arith.truncf %44 : vector<16x8xf32> to vector<16x8xbf16>
    %46 = vector.extract_strided_slice %24 {offsets = [0, 16], sizes = [16, 8], strides = [1, 1]} : vector<16x32xf32> to vector<16x8xf32>
    %47 = arith.truncf %46 : vector<16x8xf32> to vector<16x8xbf16>
    %cst_26 = arith.constant dense<0.000000e+00> : vector<16x16xf32>
    %48 = tpu.matmul %45, %47, %cst_26 {dimension_numbers = #tpu.dot_dimension_numbers<[1], [1], [0], [0], [0, 0, 1, 0], [], []>} : vector<16x8xbf16>, vector<16x8xbf16>, vector<16x16xf32> -> vector<16x16xf32>
    %cst_27 = arith.constant 0.353553385 : f32
    %49 = vector.broadcast %cst_27 : f32 to vector<16x16xf32>
    %50 = arith.mulf %48, %49 : vector<16x16xf32>
    %51 = arith.addf %50, %2 : vector<16x16xf32>
    %c32 = arith.constant 32 : index
    %c0_28 = arith.constant 0 : index
    %52 = vector.load %arg10[%c32, %c0_28] : memref<64x16xf32, #tpu.memory_space<vmem>>, vector<16x16xf32>
    tpu.vector_store %arg10[%c32, %c0_28], %51 {strides = array<i32>} : memref<64x16xf32, #tpu.memory_space<vmem>>, vector<16x16xf32>,
    %53 = vector.extract_strided_slice %23 {offsets = [0, 24], sizes = [16, 8], strides = [1, 1]} : vector<16x32xf32> to vector<16x8xf32>
    %54 = arith.truncf %53 : vector<16x8xf32> to vector<16x8xbf16>
    %55 = vector.extract_strided_slice %24 {offsets = [0, 24], sizes = [16, 8], strides = [1, 1]} : vector<16x32xf32> to vector<16x8xf32>
    %56 = arith.truncf %55 : vector<16x8xf32> to vector<16x8xbf16>
    %cst_29 = arith.constant dense<0.000000e+00> : vector<16x16xf32>
    %57 = tpu.matmul %54, %56, %cst_29 {dimension_numbers = #tpu.dot_dimension_numbers<[1], [1], [0], [0], [0, 0, 1, 0], [], []>} : vector<16x8xbf16>, vector<16x8xbf16>, vector<16x16xf32> -> vector<16x16xf32>
    %cst_30 = arith.constant 0.353553385 : f32
    %58 = vector.broadcast %cst_30 : f32 to vector<16x16xf32>
    %59 = arith.mulf %57, %58 : vector<16x16xf32>
    %60 = arith.addf %59, %2 : vector<16x16xf32>
    %c48 = arith.constant 48 : index
    %c0_31 = arith.constant 0 : index
    %61 = vector.load %arg10[%c48, %c0_31] : memref<64x16xf32, #tpu.memory_space<vmem>>, vector<16x16xf32>
    tpu.vector_store %arg10[%c48, %c0_31], %60 {strides = array<i32>} : memref<64x16xf32, #tpu.memory_space<vmem>>, vector<16x16xf32>,
    %c0_32 = arith.constant 0 : index
    %c0_33 = arith.constant 0 : index
    %62 = vector.load %arg10[%c0_32, %c0_33] : memref<64x16xf32, #tpu.memory_space<vmem>>, vector<64x16xf32>
    %cst_34 = arith.constant dense<0xFF800000> : vector<64xf32>
    %63 = vector.multi_reduction <maximumf>, %62, %cst_34 [1] : vector<64x16xf32> to vector<64xf32>
    %64 = vector.shape_cast %63 : vector<64xf32> to vector<64x1xf32>
    %65 = vector.broadcast %64 : vector<64x1xf32> to vector<64x16xf32>
    %66 = arith.subf %62, %65 : vector<64x16xf32>
    %67 = math.exp %66 : vector<64x16xf32>
    %cst_35 = arith.constant dense<0.000000e+00> : vector<64xf32>
    %68 = vector.multi_reduction <add>, %67, %cst_35 [1] : vector<64x16xf32> to vector<64xf32>
    %69 = vector.shape_cast %68 : vector<64xf32> to vector<64x1xf32>
    %70 = tpu.reciprocal %69 {approx = true} : vector<64x1xf32> -> vector<64x1xf32>
    %71 = vector.broadcast %70 : vector<64x1xf32> to vector<64x16xf32>
    %72 = arith.mulf %67, %71 : vector<64x16xf32>
    %73 = vector.extract_strided_slice %72 {offsets = [0, 0], sizes = [16, 16], strides = [1, 1]} : vector<64x16xf32> to vector<16x16xf32>
    %74 = arith.truncf %73 : vector<16x16xf32> to vector<16x16xbf16>
    %75 = vector.extract_strided_slice %25 {offsets = [0, 0], sizes = [16, 8], strides = [1, 1]} : vector<16x32xf32> to vector<16x8xf32>
    %76 = arith.truncf %75 : vector<16x8xf32> to vector<16x8xbf16>
    %cst_36 = arith.constant dense<0.000000e+00> : vector<16x8xf32>
    %77 = tpu.matmul %74, %76, %cst_36 {dimension_numbers = #tpu.dot_dimension_numbers<[1], [0], [0], [1], [0, 0, 1, 1], [], []>} : vector<16x16xbf16>, vector<16x8xbf16>, vector<16x8xf32> -> vector<16x8xf32>
    %78 = vector.extract_strided_slice %8 {offsets = [0, 0, 0], sizes = [1, 8, 32], strides = [1, 1, 1]} : vector<4x8x32xbf16> to vector<1x8x32xbf16>
    %79 = vector.shape_cast %78 : vector<1x8x32xbf16> to vector<8x32xbf16>
    %80 = arith.truncf %77 : vector<16x8xf32> to vector<16x8xbf16>
    %cst_37 = arith.constant dense<0.000000e+00> : vector<16x32xf32>
    %81 = tpu.matmul %80, %79, %cst_37 {dimension_numbers = #tpu.dot_dimension_numbers<[1], [0], [0], [1], [0, 0, 1, 1], [], []>} : vector<16x8xbf16>, vector<8x32xbf16>, vector<16x32xf32> -> vector<16x32xf32>
    %82 = vector.extract_strided_slice %72 {offsets = [16, 0], sizes = [16, 16], strides = [1, 1]} : vector<64x16xf32> to vector<16x16xf32>
    %83 = arith.truncf %82 : vector<16x16xf32> to vector<16x16xbf16>
    %84 = vector.extract_strided_slice %25 {offsets = [0, 8], sizes = [16, 8], strides = [1, 1]} : vector<16x32xf32> to vector<16x8xf32>
    %85 = arith.truncf %84 : vector<16x8xf32> to vector<16x8xbf16>
    %cst_38 = arith.constant dense<0.000000e+00> : vector<16x8xf32>
    %86 = tpu.matmul %83, %85, %cst_38 {dimension_numbers = #tpu.dot_dimension_numbers<[1], [0], [0], [1], [0, 0, 1, 1], [], []>} : vector<16x16xbf16>, vector<16x8xbf16>, vector<16x8xf32> -> vector<16x8xf32>
    %87 = vector.extract_strided_slice %8 {offsets = [1, 0, 0], sizes = [1, 8, 32], strides = [1, 1, 1]} : vector<4x8x32xbf16> to vector<1x8x32xbf16>
    %88 = vector.shape_cast %87 : vector<1x8x32xbf16> to vector<8x32xbf16>
    %89 = arith.truncf %86 : vector<16x8xf32> to vector<16x8xbf16>
    %cst_39 = arith.constant dense<0.000000e+00> : vector<16x32xf32>
    %90 = tpu.matmul %89, %88, %cst_39 {dimension_numbers = #tpu.dot_dimension_numbers<[1], [0], [0], [1], [0, 0, 1, 1], [], []>} : vector<16x8xbf16>, vector<8x32xbf16>, vector<16x32xf32> -> vector<16x32xf32>
    %91 = arith.addf %81, %90 : vector<16x32xf32>
    %92 = vector.extract_strided_slice %72 {offsets = [32, 0], sizes = [16, 16], strides = [1, 1]} : vector<64x16xf32> to vector<16x16xf32>
    %93 = arith.truncf %92 : vector<16x16xf32> to vector<16x16xbf16>
    %94 = vector.extract_strided_slice %25 {offsets = [0, 16], sizes = [16, 8], strides = [1, 1]} : vector<16x32xf32> to vector<16x8xf32>
    %95 = arith.truncf %94 : vector<16x8xf32> to vector<16x8xbf16>
    %cst_40 = arith.constant dense<0.000000e+00> : vector<16x8xf32>
    %96 = tpu.matmul %93, %95, %cst_40 {dimension_numbers = #tpu.dot_dimension_numbers<[1], [0], [0], [1], [0, 0, 1, 1], [], []>} : vector<16x16xbf16>, vector<16x8xbf16>, vector<16x8xf32> -> vector<16x8xf32>
    %97 = vector.extract_strided_slice %8 {offsets = [2, 0, 0], sizes = [1, 8, 32], strides = [1, 1, 1]} : vector<4x8x32xbf16> to vector<1x8x32xbf16>
    %98 = vector.shape_cast %97 : vector<1x8x32xbf16> to vector<8x32xbf16>
    %99 = arith.truncf %96 : vector<16x8xf32> to vector<16x8xbf16>
    %cst_41 = arith.constant dense<0.000000e+00> : vector<16x32xf32>
    %100 = tpu.matmul %99, %98, %cst_41 {dimension_numbers = #tpu.dot_dimension_numbers<[1], [0], [0], [1], [0, 0, 1, 1], [], []>} : vector<16x8xbf16>, vector<8x32xbf16>, vector<16x32xf32> -> vector<16x32xf32>
    %101 = arith.addf %91, %100 : vector<16x32xf32>
    %102 = vector.extract_strided_slice %72 {offsets = [48, 0], sizes = [16, 16], strides = [1, 1]} : vector<64x16xf32> to vector<16x16xf32>
    %103 = arith.truncf %102 : vector<16x16xf32> to vector<16x16xbf16>
    %104 = vector.extract_strided_slice %25 {offsets = [0, 24], sizes = [16, 8], strides = [1, 1]} : vector<16x32xf32> to vector<16x8xf32>
    %105 = arith.truncf %104 : vector<16x8xf32> to vector<16x8xbf16>
    %cst_42 = arith.constant dense<0.000000e+00> : vector<16x8xf32>
    %106 = tpu.matmul %103, %105, %cst_42 {dimension_numbers = #tpu.dot_dimension_numbers<[1], [0], [0], [1], [0, 0, 1, 1], [], []>} : vector<16x16xbf16>, vector<16x8xbf16>, vector<16x8xf32> -> vector<16x8xf32>
    %107 = vector.extract_strided_slice %8 {offsets = [3, 0, 0], sizes = [1, 8, 32], strides = [1, 1, 1]} : vector<4x8x32xbf16> to vector<1x8x32xbf16>
    %108 = vector.shape_cast %107 : vector<1x8x32xbf16> to vector<8x32xbf16>
    %109 = arith.truncf %106 : vector<16x8xf32> to vector<16x8xbf16>
    %cst_43 = arith.constant dense<0.000000e+00> : vector<16x32xf32>
    %110 = tpu.matmul %109, %108, %cst_43 {dimension_numbers = #tpu.dot_dimension_numbers<[1], [0], [0], [1], [0, 0, 1, 1], [], []>} : vector<16x8xbf16>, vector<8x32xbf16>, vector<16x32xf32> -> vector<16x32xf32>
    %111 = arith.addf %101, %110 : vector<16x32xf32>
    %112 = arith.addf %0, %111 : vector<16x32xf32>
    %cst_44 = arith.constant dense<0.000000e+00> : vector<16xf32>
    %113 = vector.multi_reduction <add>, %112, %cst_44 [1] : vector<16x32xf32> to vector<16xf32>
    %114 = vector.shape_cast %113 : vector<16xf32> to vector<16x1xf32>
    %cst_45 = arith.constant 3.200000e+01 : f32
    %115 = vector.broadcast %cst_45 : f32 to vector<16x1xf32>
    %116 = arith.divf %114, %115 : vector<16x1xf32>
    %117 = vector.broadcast %116 : vector<16x1xf32> to vector<16x32xf32>
    %118 = arith.subf %112, %117 : vector<16x32xf32>
    %119 = vector.broadcast %116 : vector<16x1xf32> to vector<16x32xf32>
    %120 = arith.subf %112, %119 : vector<16x32xf32>
    %121 = arith.mulf %118, %120 : vector<16x32xf32>
    %cst_46 = arith.constant dense<0.000000e+00> : vector<16xf32>
    %122 = vector.multi_reduction <add>, %121, %cst_46 [1] : vector<16x32xf32> to vector<16xf32>
    %123 = vector.shape_cast %122 : vector<16xf32> to vector<16x1xf32>
    %cst_47 = arith.constant 3.200000e+01 : f32
    %124 = vector.broadcast %cst_47 : f32 to vector<16x1xf32>
    %125 = arith.divf %123, %124 : vector<16x1xf32>
    %126 = vector.broadcast %116 : vector<16x1xf32> to vector<16x32xf32>
    %127 = arith.subf %112, %126 : vector<16x32xf32>
    %cst_48 = arith.constant 9.99999996E-13 : f32
    %128 = vector.broadcast %cst_48 : f32 to vector<16x1xf32>
    %129 = arith.addf %125, %128 : vector<16x1xf32>
    %130 = math.rsqrt %129 : vector<16x1xf32>
    %131 = vector.broadcast %130 : vector<16x1xf32> to vector<16x32xf32>
    %132 = arith.mulf %127, %131 : vector<16x32xf32>
    %133 = vector.broadcast %15 : vector<1x32xf32> to vector<16x32xf32>
    %134 = arith.mulf %132, %133 : vector<16x32xf32>
    %135 = vector.broadcast %16 : vector<1x32xf32> to vector<16x32xf32>
    %136 = arith.addf %134, %135 : vector<16x32xf32>
    %137 = arith.truncf %136 : vector<16x32xf32> to vector<16x32xbf16>
    %cst_49 = arith.constant dense<0.000000e+00> : vector<16x64xf32>
    %138 = tpu.matmul %137, %10, %cst_49 {dimension_numbers = #tpu.dot_dimension_numbers<[1], [0], [0], [1], [0, 0, 1, 1], [], []>} : vector<16x32xbf16>, vector<32x64xbf16>, vector<16x64xf32> -> vector<16x64xf32>
    %139 = vector.broadcast %17 : vector<1x64xf32> to vector<16x64xf32>
    %140 = arith.addf %138, %139 : vector<16x64xf32>
    %cst_50 = arith.constant 5.000000e-01 : f32
    %141 = vector.broadcast %cst_50 : f32 to vector<16x64xf32>
    %142 = arith.mulf %141, %140 : vector<16x64xf32>
    %cst_51 = arith.constant 4.471500e-02 : f32
    %143 = vector.broadcast %cst_51 : f32 to vector<16x64xf32>
    %144 = arith.mulf %143, %140 : vector<16x64xf32>
    %145 = arith.mulf %144, %140 : vector<16x64xf32>
    %146 = arith.mulf %145, %140 : vector<16x64xf32>
    %147 = arith.addf %140, %146 : vector<16x64xf32>
    %cst_52 = arith.constant 0.797884583 : f32
    %148 = vector.broadcast %cst_52 : f32 to vector<16x64xf32>
    %149 = arith.mulf %148, %147 : vector<16x64xf32>
    %150 = math.tanh %149 : vector<16x64xf32>
    %cst_53 = arith.constant 1.000000e+00 : f32
    %151 = vector.broadcast %cst_53 : f32 to vector<16x64xf32>
    %152 = arith.addf %151, %150 : vector<16x64xf32>
    %153 = arith.mulf %142, %152 : vector<16x64xf32>
    %154 = arith.truncf %153 : vector<16x64xf32> to vector<16x64xbf16>
    %cst_54 = arith.constant dense<0.000000e+00> : vector<16x32xf32>
    %155 = tpu.matmul %154, %12, %cst_54 {dimension_numbers = #tpu.dot_dimension_numbers<[1], [0], [0], [1], [0, 0, 1, 1], [], []>} : vector<16x64xbf16>, vector<64x32xbf16>, vector<16x32xf32> -> vector<16x32xf32>
    %156 = vector.broadcast %18 : vector<1x32xf32> to vector<16x32xf32>
    %157 = arith.addf %155, %156 : vector<16x32xf32>
    %158 = arith.addf %136, %157 : vector<16x32xf32>
    %cst_55 = arith.constant dense<0.000000e+00> : vector<16xf32>
    %159 = vector.multi_reduction <add>, %158, %cst_55 [1] : vector<16x32xf32> to vector<16xf32>
    %160 = vector.shape_cast %159 : vector<16xf32> to vector<16x1xf32>
    %cst_56 = arith.constant 3.200000e+01 : f32
    %161 = vector.broadcast %cst_56 : f32 to vector<16x1xf32>
    %162 = arith.divf %160, %161 : vector<16x1xf32>
    %163 = vector.broadcast %162 : vector<16x1xf32> to vector<16x32xf32>
    %164 = arith.subf %158, %163 : vector<16x32xf32>
    %165 = vector.broadcast %162 : vector<16x1xf32> to vector<16x32xf32>
    %166 = arith.subf %158, %165 : vector<16x32xf32>
    %167 = arith.mulf %164, %166 : vector<16x32xf32>
    %cst_57 = arith.constant dense<0.000000e+00> : vector<16xf32>
    %168 = vector.multi_reduction <add>, %167, %cst_57 [1] : vector<16x32xf32> to vector<16xf32>
    %169 = vector.shape_cast %168 : vector<16xf32> to vector<16x1xf32>
    %cst_58 = arith.constant 3.200000e+01 : f32
    %170 = vector.broadcast %cst_58 : f32 to vector<16x1xf32>
    %171 = arith.divf %169, %170 : vector<16x1xf32>
    %172 = vector.broadcast %162 : vector<16x1xf32> to vector<16x32xf32>
    %173 = arith.subf %158, %172 : vector<16x32xf32>
    %cst_59 = arith.constant 9.99999996E-13 : f32
    %174 = vector.broadcast %cst_59 : f32 to vector<16x1xf32>
    %175 = arith.addf %171, %174 : vector<16x1xf32>
    %176 = math.rsqrt %175 : vector<16x1xf32>
    %177 = vector.broadcast %176 : vector<16x1xf32> to vector<16x32xf32>
    %178 = arith.mulf %173, %177 : vector<16x32xf32>
    %179 = vector.broadcast %19 : vector<1x32xf32> to vector<16x32xf32>
    %180 = arith.mulf %178, %179 : vector<16x32xf32>
    %181 = vector.broadcast %20 : vector<1x32xf32> to vector<16x32xf32>
    %182 = arith.addf %180, %181 : vector<16x32xf32>
    %c1 = arith.constant 1 : index
    %c0_60 = arith.constant 0 : index
    %c0_61 = arith.constant 0 : index
    %183 = vector.load %arg2[%c1, %c0_60, %c0_61] : memref<2x32x96xbf16, #tpu.memory_space<vmem>>, vector<1x32x96xbf16>
    %184 = vector.shape_cast %183 : vector<1x32x96xbf16> to vector<32x96xbf16>
    %c1_62 = arith.constant 1 : index
    %c0_63 = arith.constant 0 : index
    %c0_64 = arith.constant 0 : index
    %c0_65 = arith.constant 0 : index
    %185 = vector.load %arg3[%c1_62, %c0_63, %c0_64, %c0_65] : memref<2x4x8x32xbf16, #tpu.memory_space<vmem>>, vector<1x4x8x32xbf16>
    %186 = vector.shape_cast %185 : vector<1x4x8x32xbf16> to vector<4x8x32xbf16>
    %c1_66 = arith.constant 1 : index
    %c0_67 = arith.constant 0 : index
    %c0_68 = arith.constant 0 : index
    %187 = vector.load %arg4[%c1_66, %c0_67, %c0_68] : memref<2x32x64xbf16, #tpu.memory_space<vmem>>, vector<1x32x64xbf16>
    %188 = vector.shape_cast %187 : vector<1x32x64xbf16> to vector<32x64xbf16>
    %c1_69 = arith.constant 1 : index
    %c0_70 = arith.constant 0 : index
    %c0_71 = arith.constant 0 : index
    %189 = vector.load %arg5[%c1_69, %c0_70, %c0_71] : memref<2x64x32xbf16, #tpu.memory_space<vmem>>, vector<1x64x32xbf16>
    %190 = vector.shape_cast %189 : vector<1x64x32xbf16> to vector<64x32xbf16>
    %c1_72 = arith.constant 1 : index
    %c0_73 = arith.constant 0 : index
    %c0_74 = arith.constant 0 : index
    %191 = vector.load %arg6[%c1_72, %c0_73, %c0_74] : memref<2x8x64xf32, #tpu.memory_space<vmem>>, vector<1x8x64xf32>
    %192 = vector.shape_cast %191 : vector<1x8x64xf32> to vector<8x64xf32>
    %193 = vector.extract_strided_slice %192 {offsets = [0, 0], sizes = [1, 32], strides = [1, 1]} : vector<8x64xf32> to vector<1x32xf32>
    %194 = vector.extract_strided_slice %192 {offsets = [1, 0], sizes = [1, 32], strides = [1, 1]} : vector<8x64xf32> to vector<1x32xf32>
    %195 = vector.extract_strided_slice %192 {offsets = [2, 0], sizes = [1, 64], strides = [1, 1]} : vector<8x64xf32> to vector<1x64xf32>
    %196 = vector.extract_strided_slice %192 {offsets = [3, 0], sizes = [1, 32], strides = [1, 1]} : vector<8x64xf32> to vector<1x32xf32>
    %197 = vector.extract_strided_slice %192 {offsets = [4, 0], sizes = [1, 32], strides = [1, 1]} : vector<8x64xf32> to vector<1x32xf32>
    %198 = vector.extract_strided_slice %192 {offsets = [5, 0], sizes = [1, 32], strides = [1, 1]} : vector<8x64xf32> to vector<1x32xf32>
    %199 = arith.truncf %182 : vector<16x32xf32> to vector<16x32xbf16>
    %cst_75 = arith.constant dense<0.000000e+00> : vector<16x96xf32>
    %200 = tpu.matmul %199, %184, %cst_75 {dimension_numbers = #tpu.dot_dimension_numbers<[1], [0], [0], [1], [0, 0, 1, 1], [], []>} : vector<16x32xbf16>, vector<32x96xbf16>, vector<16x96xf32> -> vector<16x96xf32>
    %201 = vector.extract_strided_slice %200 {offsets = [0, 0], sizes = [16, 32], strides = [1, 1]} : vector<16x96xf32> to vector<16x32xf32>
    %202 = vector.extract_strided_slice %200 {offsets = [0, 32], sizes = [16, 32], strides = [1, 1]} : vector<16x96xf32> to vector<16x32xf32>
    %203 = vector.extract_strided_slice %200 {offsets = [0, 64], sizes = [16, 32], strides = [1, 1]} : vector<16x96xf32> to vector<16x32xf32>
    %204 = vector.extract_strided_slice %201 {offsets = [0, 0], sizes = [16, 8], strides = [1, 1]} : vector<16x32xf32> to vector<16x8xf32>
    %205 = arith.truncf %204 : vector<16x8xf32> to vector<16x8xbf16>
    %206 = vector.extract_strided_slice %202 {offsets = [0, 0], sizes = [16, 8], strides = [1, 1]} : vector<16x32xf32> to vector<16x8xf32>
    %207 = arith.truncf %206 : vector<16x8xf32> to vector<16x8xbf16>
    %cst_76 = arith.constant dense<0.000000e+00> : vector<16x16xf32>
    %208 = tpu.matmul %205, %207, %cst_76 {dimension_numbers = #tpu.dot_dimension_numbers<[1], [1], [0], [0], [0, 0, 1, 0], [], []>} : vector<16x8xbf16>, vector<16x8xbf16>, vector<16x16xf32> -> vector<16x16xf32>
    %cst_77 = arith.constant 0.353553385 : f32
    %209 = vector.broadcast %cst_77 : f32 to vector<16x16xf32>
    %210 = arith.mulf %208, %209 : vector<16x16xf32>
    %211 = arith.addf %210, %2 : vector<16x16xf32>
    %c0_78 = arith.constant 0 : index
    %c0_79 = arith.constant 0 : index
    %212 = vector.load %arg10[%c0_78, %c0_79] : memref<64x16xf32, #tpu.memory_space<vmem>>, vector<16x16xf32>
    tpu.vector_store %arg10[%c0_78, %c0_79], %211 {strides = array<i32>} : memref<64x16xf32, #tpu.memory_space<vmem>>, vector<16x16xf32>,
    %213 = vector.extract_strided_slice %201 {offsets = [0, 8], sizes = [16, 8], strides = [1, 1]} : vector<16x32xf32> to vector<16x8xf32>
    %214 = arith.truncf %213 : vector<16x8xf32> to vector<16x8xbf16>
    %215 = vector.extract_strided_slice %202 {offsets = [0, 8], sizes = [16, 8], strides = [1, 1]} : vector<16x32xf32> to vector<16x8xf32>
    %216 = arith.truncf %215 : vector<16x8xf32> to vector<16x8xbf16>
    %cst_80 = arith.constant dense<0.000000e+00> : vector<16x16xf32>
    %217 = tpu.matmul %214, %216, %cst_80 {dimension_numbers = #tpu.dot_dimension_numbers<[1], [1], [0], [0], [0, 0, 1, 0], [], []>} : vector<16x8xbf16>, vector<16x8xbf16>, vector<16x16xf32> -> vector<16x16xf32>
    %cst_81 = arith.constant 0.353553385 : f32
    %218 = vector.broadcast %cst_81 : f32 to vector<16x16xf32>
    %219 = arith.mulf %217, %218 : vector<16x16xf32>
    %220 = arith.addf %219, %2 : vector<16x16xf32>
    %c16_82 = arith.constant 16 : index
    %c0_83 = arith.constant 0 : index
    %221 = vector.load %arg10[%c16_82, %c0_83] : memref<64x16xf32, #tpu.memory_space<vmem>>, vector<16x16xf32>
    tpu.vector_store %arg10[%c16_82, %c0_83], %220 {strides = array<i32>} : memref<64x16xf32, #tpu.memory_space<vmem>>, vector<16x16xf32>,
    %222 = vector.extract_strided_slice %201 {offsets = [0, 16], sizes = [16, 8], strides = [1, 1]} : vector<16x32xf32> to vector<16x8xf32>
    %223 = arith.truncf %222 : vector<16x8xf32> to vector<16x8xbf16>
    %224 = vector.extract_strided_slice %202 {offsets = [0, 16], sizes = [16, 8], strides = [1, 1]} : vector<16x32xf32> to vector<16x8xf32>
    %225 = arith.truncf %224 : vector<16x8xf32> to vector<16x8xbf16>
    %cst_84 = arith.constant dense<0.000000e+00> : vector<16x16xf32>
    %226 = tpu.matmul %223, %225, %cst_84 {dimension_numbers = #tpu.dot_dimension_numbers<[1], [1], [0], [0], [0, 0, 1, 0], [], []>} : vector<16x8xbf16>, vector<16x8xbf16>, vector<16x16xf32> -> vector<16x16xf32>
    %cst_85 = arith.constant 0.353553385 : f32
    %227 = vector.broadcast %cst_85 : f32 to vector<16x16xf32>
    %228 = arith.mulf %226, %227 : vector<16x16xf32>
    %229 = arith.addf %228, %2 : vector<16x16xf32>
    %c32_86 = arith.constant 32 : index
    %c0_87 = arith.constant 0 : index
    %230 = vector.load %arg10[%c32_86, %c0_87] : memref<64x16xf32, #tpu.memory_space<vmem>>, vector<16x16xf32>
    tpu.vector_store %arg10[%c32_86, %c0_87], %229 {strides = array<i32>} : memref<64x16xf32, #tpu.memory_space<vmem>>, vector<16x16xf32>,
    %231 = vector.extract_strided_slice %201 {offsets = [0, 24], sizes = [16, 8], strides = [1, 1]} : vector<16x32xf32> to vector<16x8xf32>
    %232 = arith.truncf %231 : vector<16x8xf32> to vector<16x8xbf16>
    %233 = vector.extract_strided_slice %202 {offsets = [0, 24], sizes = [16, 8], strides = [1, 1]} : vector<16x32xf32> to vector<16x8xf32>
    %234 = arith.truncf %233 : vector<16x8xf32> to vector<16x8xbf16>
    %cst_88 = arith.constant dense<0.000000e+00> : vector<16x16xf32>
    %235 = tpu.matmul %232, %234, %cst_88 {dimension_numbers = #tpu.dot_dimension_numbers<[1], [1], [0], [0], [0, 0, 1, 0], [], []>} : vector<16x8xbf16>, vector<16x8xbf16>, vector<16x16xf32> -> vector<16x16xf32>
    %cst_89 = arith.constant 0.353553385 : f32
    %236 = vector.broadcast %cst_89 : f32 to vector<16x16xf32>
    %237 = arith.mulf %235, %236 : vector<16x16xf32>
    %238 = arith.addf %237, %2 : vector<16x16xf32>
    %c48_90 = arith.constant 48 : index
    %c0_91 = arith.constant 0 : index
    %239 = vector.load %arg10[%c48_90, %c0_91] : memref<64x16xf32, #tpu.memory_space<vmem>>, vector<16x16xf32>
    tpu.vector_store %arg10[%c48_90, %c0_91], %238 {strides = array<i32>} : memref<64x16xf32, #tpu.memory_space<vmem>>, vector<16x16xf32>,
    %c0_92 = arith.constant 0 : index
    %c0_93 = arith.constant 0 : index
    %240 = vector.load %arg10[%c0_92, %c0_93] : memref<64x16xf32, #tpu.memory_space<vmem>>, vector<64x16xf32>
    %cst_94 = arith.constant dense<0xFF800000> : vector<64xf32>
    %241 = vector.multi_reduction <maximumf>, %240, %cst_94 [1] : vector<64x16xf32> to vector<64xf32>
    %242 = vector.shape_cast %241 : vector<64xf32> to vector<64x1xf32>
    %243 = vector.broadcast %242 : vector<64x1xf32> to vector<64x16xf32>
    %244 = arith.subf %240, %243 : vector<64x16xf32>
    %245 = math.exp %244 : vector<64x16xf32>
    %cst_95 = arith.constant dense<0.000000e+00> : vector<64xf32>
    %246 = vector.multi_reduction <add>, %245, %cst_95 [1] : vector<64x16xf32> to vector<64xf32>
    %247 = vector.shape_cast %246 : vector<64xf32> to vector<64x1xf32>
    %248 = tpu.reciprocal %247 {approx = true} : vector<64x1xf32> -> vector<64x1xf32>
    %249 = vector.broadcast %248 : vector<64x1xf32> to vector<64x16xf32>
    %250 = arith.mulf %245, %249 : vector<64x16xf32>
    %251 = vector.extract_strided_slice %250 {offsets = [0, 0], sizes = [16, 16], strides = [1, 1]} : vector<64x16xf32> to vector<16x16xf32>
    %252 = arith.truncf %251 : vector<16x16xf32> to vector<16x16xbf16>
    %253 = vector.extract_strided_slice %203 {offsets = [0, 0], sizes = [16, 8], strides = [1, 1]} : vector<16x32xf32> to vector<16x8xf32>
    %254 = arith.truncf %253 : vector<16x8xf32> to vector<16x8xbf16>
    %cst_96 = arith.constant dense<0.000000e+00> : vector<16x8xf32>
    %255 = tpu.matmul %252, %254, %cst_96 {dimension_numbers = #tpu.dot_dimension_numbers<[1], [0], [0], [1], [0, 0, 1, 1], [], []>} : vector<16x16xbf16>, vector<16x8xbf16>, vector<16x8xf32> -> vector<16x8xf32>
    %256 = vector.extract_strided_slice %186 {offsets = [0, 0, 0], sizes = [1, 8, 32], strides = [1, 1, 1]} : vector<4x8x32xbf16> to vector<1x8x32xbf16>
    %257 = vector.shape_cast %256 : vector<1x8x32xbf16> to vector<8x32xbf16>
    %258 = arith.truncf %255 : vector<16x8xf32> to vector<16x8xbf16>
    %cst_97 = arith.constant dense<0.000000e+00> : vector<16x32xf32>
    %259 = tpu.matmul %258, %257, %cst_97 {dimension_numbers = #tpu.dot_dimension_numbers<[1], [0], [0], [1], [0, 0, 1, 1], [], []>} : vector<16x8xbf16>, vector<8x32xbf16>, vector<16x32xf32> -> vector<16x32xf32>
    %260 = vector.extract_strided_slice %250 {offsets = [16, 0], sizes = [16, 16], strides = [1, 1]} : vector<64x16xf32> to vector<16x16xf32>
    %261 = arith.truncf %260 : vector<16x16xf32> to vector<16x16xbf16>
    %262 = vector.extract_strided_slice %203 {offsets = [0, 8], sizes = [16, 8], strides = [1, 1]} : vector<16x32xf32> to vector<16x8xf32>
    %263 = arith.truncf %262 : vector<16x8xf32> to vector<16x8xbf16>
    %cst_98 = arith.constant dense<0.000000e+00> : vector<16x8xf32>
    %264 = tpu.matmul %261, %263, %cst_98 {dimension_numbers = #tpu.dot_dimension_numbers<[1], [0], [0], [1], [0, 0, 1, 1], [], []>} : vector<16x16xbf16>, vector<16x8xbf16>, vector<16x8xf32> -> vector<16x8xf32>
    %265 = vector.extract_strided_slice %186 {offsets = [1, 0, 0], sizes = [1, 8, 32], strides = [1, 1, 1]} : vector<4x8x32xbf16> to vector<1x8x32xbf16>
    %266 = vector.shape_cast %265 : vector<1x8x32xbf16> to vector<8x32xbf16>
    %267 = arith.truncf %264 : vector<16x8xf32> to vector<16x8xbf16>
    %cst_99 = arith.constant dense<0.000000e+00> : vector<16x32xf32>
    %268 = tpu.matmul %267, %266, %cst_99 {dimension_numbers = #tpu.dot_dimension_numbers<[1], [0], [0], [1], [0, 0, 1, 1], [], []>} : vector<16x8xbf16>, vector<8x32xbf16>, vector<16x32xf32> -> vector<16x32xf32>
    %269 = arith.addf %259, %268 : vector<16x32xf32>
    %270 = vector.extract_strided_slice %250 {offsets = [32, 0], sizes = [16, 16], strides = [1, 1]} : vector<64x16xf32> to vector<16x16xf32>
    %271 = arith.truncf %270 : vector<16x16xf32> to vector<16x16xbf16>
    %272 = vector.extract_strided_slice %203 {offsets = [0, 16], sizes = [16, 8], strides = [1, 1]} : vector<16x32xf32> to vector<16x8xf32>
    %273 = arith.truncf %272 : vector<16x8xf32> to vector<16x8xbf16>
    %cst_100 = arith.constant dense<0.000000e+00> : vector<16x8xf32>
    %274 = tpu.matmul %271, %273, %cst_100 {dimension_numbers = #tpu.dot_dimension_numbers<[1], [0], [0], [1], [0, 0, 1, 1], [], []>} : vector<16x16xbf16>, vector<16x8xbf16>, vector<16x8xf32> -> vector<16x8xf32>
    %275 = vector.extract_strided_slice %186 {offsets = [2, 0, 0], sizes = [1, 8, 32], strides = [1, 1, 1]} : vector<4x8x32xbf16> to vector<1x8x32xbf16>
    %276 = vector.shape_cast %275 : vector<1x8x32xbf16> to vector<8x32xbf16>
    %277 = arith.truncf %274 : vector<16x8xf32> to vector<16x8xbf16>
    %cst_101 = arith.constant dense<0.000000e+00> : vector<16x32xf32>
    %278 = tpu.matmul %277, %276, %cst_101 {dimension_numbers = #tpu.dot_dimension_numbers<[1], [0], [0], [1], [0, 0, 1, 1], [], []>} : vector<16x8xbf16>, vector<8x32xbf16>, vector<16x32xf32> -> vector<16x32xf32>
    %279 = arith.addf %269, %278 : vector<16x32xf32>
    %280 = vector.extract_strided_slice %250 {offsets = [48, 0], sizes = [16, 16], strides = [1, 1]} : vector<64x16xf32> to vector<16x16xf32>
    %281 = arith.truncf %280 : vector<16x16xf32> to vector<16x16xbf16>
    %282 = vector.extract_strided_slice %203 {offsets = [0, 24], sizes = [16, 8], strides = [1, 1]} : vector<16x32xf32> to vector<16x8xf32>
    %283 = arith.truncf %282 : vector<16x8xf32> to vector<16x8xbf16>
    %cst_102 = arith.constant dense<0.000000e+00> : vector<16x8xf32>
    %284 = tpu.matmul %281, %283, %cst_102 {dimension_numbers = #tpu.dot_dimension_numbers<[1], [0], [0], [1], [0, 0, 1, 1], [], []>} : vector<16x16xbf16>, vector<16x8xbf16>, vector<16x8xf32> -> vector<16x8xf32>
    %285 = vector.extract_strided_slice %186 {offsets = [3, 0, 0], sizes = [1, 8, 32], strides = [1, 1, 1]} : vector<4x8x32xbf16> to vector<1x8x32xbf16>
    %286 = vector.shape_cast %285 : vector<1x8x32xbf16> to vector<8x32xbf16>
    %287 = arith.truncf %284 : vector<16x8xf32> to vector<16x8xbf16>
    %cst_103 = arith.constant dense<0.000000e+00> : vector<16x32xf32>
    %288 = tpu.matmul %287, %286, %cst_103 {dimension_numbers = #tpu.dot_dimension_numbers<[1], [0], [0], [1], [0, 0, 1, 1], [], []>} : vector<16x8xbf16>, vector<8x32xbf16>, vector<16x32xf32> -> vector<16x32xf32>
    %289 = arith.addf %279, %288 : vector<16x32xf32>
    %290 = arith.addf %182, %289 : vector<16x32xf32>
    %cst_104 = arith.constant dense<0.000000e+00> : vector<16xf32>
    %291 = vector.multi_reduction <add>, %290, %cst_104 [1] : vector<16x32xf32> to vector<16xf32>
    %292 = vector.shape_cast %291 : vector<16xf32> to vector<16x1xf32>
    %cst_105 = arith.constant 3.200000e+01 : f32
    %293 = vector.broadcast %cst_105 : f32 to vector<16x1xf32>
    %294 = arith.divf %292, %293 : vector<16x1xf32>
    %295 = vector.broadcast %294 : vector<16x1xf32> to vector<16x32xf32>
    %296 = arith.subf %290, %295 : vector<16x32xf32>
    %297 = vector.broadcast %294 : vector<16x1xf32> to vector<16x32xf32>
    %298 = arith.subf %290, %297 : vector<16x32xf32>
    %299 = arith.mulf %296, %298 : vector<16x32xf32>
    %cst_106 = arith.constant dense<0.000000e+00> : vector<16xf32>
    %300 = vector.multi_reduction <add>, %299, %cst_106 [1] : vector<16x32xf32> to vector<16xf32>
    %301 = vector.shape_cast %300 : vector<16xf32> to vector<16x1xf32>
    %cst_107 = arith.constant 3.200000e+01 : f32
    %302 = vector.broadcast %cst_107 : f32 to vector<16x1xf32>
    %303 = arith.divf %301, %302 : vector<16x1xf32>
    %304 = vector.broadcast %294 : vector<16x1xf32> to vector<16x32xf32>
    %305 = arith.subf %290, %304 : vector<16x32xf32>
    %cst_108 = arith.constant 9.99999996E-13 : f32
    %306 = vector.broadcast %cst_108 : f32 to vector<16x1xf32>
    %307 = arith.addf %303, %306 : vector<16x1xf32>
    %308 = math.rsqrt %307 : vector<16x1xf32>
    %309 = vector.broadcast %308 : vector<16x1xf32> to vector<16x32xf32>
    %310 = arith.mulf %305, %309 : vector<16x32xf32>
    %311 = vector.broadcast %193 : vector<1x32xf32> to vector<16x32xf32>
    %312 = arith.mulf %310, %311 : vector<16x32xf32>
    %313 = vector.broadcast %194 : vector<1x32xf32> to vector<16x32xf32>
    %314 = arith.addf %312, %313 : vector<16x32xf32>
    %315 = arith.truncf %314 : vector<16x32xf32> to vector<16x32xbf16>
    %cst_109 = arith.constant dense<0.000000e+00> : vector<16x64xf32>
    %316 = tpu.matmul %315, %188, %cst_109 {dimension_numbers = #tpu.dot_dimension_numbers<[1], [0], [0], [1], [0, 0, 1, 1], [], []>} : vector<16x32xbf16>, vector<32x64xbf16>, vector<16x64xf32> -> vector<16x64xf32>
    %317 = vector.broadcast %195 : vector<1x64xf32> to vector<16x64xf32>
    %318 = arith.addf %316, %317 : vector<16x64xf32>
    %cst_110 = arith.constant 5.000000e-01 : f32
    %319 = vector.broadcast %cst_110 : f32 to vector<16x64xf32>
    %320 = arith.mulf %319, %318 : vector<16x64xf32>
    %cst_111 = arith.constant 4.471500e-02 : f32
    %321 = vector.broadcast %cst_111 : f32 to vector<16x64xf32>
    %322 = arith.mulf %321, %318 : vector<16x64xf32>
    %323 = arith.mulf %322, %318 : vector<16x64xf32>
    %324 = arith.mulf %323, %318 : vector<16x64xf32>
    %325 = arith.addf %318, %324 : vector<16x64xf32>
    %cst_112 = arith.constant 0.797884583 : f32
    %326 = vector.broadcast %cst_112 : f32 to vector<16x64xf32>
    %327 = arith.mulf %326, %325 : vector<16x64xf32>
    %328 = math.tanh %327 : vector<16x64xf32>
    %cst_113 = arith.constant 1.000000e+00 : f32
    %329 = vector.broadcast %cst_113 : f32 to vector<16x64xf32>
    %330 = arith.addf %329, %328 : vector<16x64xf32>
    %331 = arith.mulf %320, %330 : vector<16x64xf32>
    %332 = arith.truncf %331 : vector<16x64xf32> to vector<16x64xbf16>
    %cst_114 = arith.constant dense<0.000000e+00> : vector<16x32xf32>
    %333 = tpu.matmul %332, %190, %cst_114 {dimension_numbers = #tpu.dot_dimension_numbers<[1], [0], [0], [1], [0, 0, 1, 1], [], []>} : vector<16x64xbf16>, vector<64x32xbf16>, vector<16x32xf32> -> vector<16x32xf32>
    %334 = vector.broadcast %196 : vector<1x32xf32> to vector<16x32xf32>
    %335 = arith.addf %333, %334 : vector<16x32xf32>
    %336 = arith.addf %314, %335 : vector<16x32xf32>
    %cst_115 = arith.constant dense<0.000000e+00> : vector<16xf32>
    %337 = vector.multi_reduction <add>, %336, %cst_115 [1] : vector<16x32xf32> to vector<16xf32>
    %338 = vector.shape_cast %337 : vector<16xf32> to vector<16x1xf32>
    %cst_116 = arith.constant 3.200000e+01 : f32
    %339 = vector.broadcast %cst_116 : f32 to vector<16x1xf32>
    %340 = arith.divf %338, %339 : vector<16x1xf32>
    %341 = vector.broadcast %340 : vector<16x1xf32> to vector<16x32xf32>
    %342 = arith.subf %336, %341 : vector<16x32xf32>
    %343 = vector.broadcast %340 : vector<16x1xf32> to vector<16x32xf32>
    %344 = arith.subf %336, %343 : vector<16x32xf32>
    %345 = arith.mulf %342, %344 : vector<16x32xf32>
    %cst_117 = arith.constant dense<0.000000e+00> : vector<16xf32>
    %346 = vector.multi_reduction <add>, %345, %cst_117 [1] : vector<16x32xf32> to vector<16xf32>
    %347 = vector.shape_cast %346 : vector<16xf32> to vector<16x1xf32>
    %cst_118 = arith.constant 3.200000e+01 : f32
    %348 = vector.broadcast %cst_118 : f32 to vector<16x1xf32>
    %349 = arith.divf %347, %348 : vector<16x1xf32>
    %350 = vector.broadcast %340 : vector<16x1xf32> to vector<16x32xf32>
    %351 = arith.subf %336, %350 : vector<16x32xf32>
    %cst_119 = arith.constant 9.99999996E-13 : f32
    %352 = vector.broadcast %cst_119 : f32 to vector<16x1xf32>
    %353 = arith.addf %349, %352 : vector<16x1xf32>
    %354 = math.rsqrt %353 : vector<16x1xf32>
    %355 = vector.broadcast %354 : vector<16x1xf32> to vector<16x32xf32>
    %356 = arith.mulf %351, %355 : vector<16x32xf32>
    %357 = vector.broadcast %197 : vector<1x32xf32> to vector<16x32xf32>
    %358 = arith.mulf %356, %357 : vector<16x32xf32>
    %359 = vector.broadcast %198 : vector<1x32xf32> to vector<16x32xf32>
    %360 = arith.addf %358, %359 : vector<16x32xf32>
    %c0_120 = arith.constant 0 : index
    %c0_121 = arith.constant 0 : index
    %361 = vector.load %arg7[%c0_120, %c0_121] : memref<32x16xbf16, #tpu.memory_space<vmem>>, vector<32x16xbf16>
    %362 = arith.truncf %360 : vector<16x32xf32> to vector<16x32xbf16>
    %cst_122 = arith.constant dense<0.000000e+00> : vector<16x16xf32>
    %363 = tpu.matmul %362, %361, %cst_122 {dimension_numbers = #tpu.dot_dimension_numbers<[1], [0], [0], [1], [0, 0, 1, 1], [], []>} : vector<16x32xbf16>, vector<32x16xbf16>, vector<16x16xf32> -> vector<16x16xf32>
    %364 = vector.broadcast %3 : vector<1x16xf32> to vector<16x16xf32>
    %365 = arith.addf %363, %364 : vector<16x16xf32>
    %366 = math.tanh %365 : vector<16x16xf32>
    %c0_123 = arith.constant 0 : index
    %c0_124 = arith.constant 0 : index
    %367 = vector.load %arg8[%c0_123, %c0_124] : memref<16x128xbf16, #tpu.memory_space<vmem>>, vector<16x128xbf16>
    %368 = arith.truncf %366 : vector<16x16xf32> to vector<16x16xbf16>
    %cst_125 = arith.constant dense<0.000000e+00> : vector<16x128xf32>
    %369 = tpu.matmul %368, %367, %cst_125 {dimension_numbers = #tpu.dot_dimension_numbers<[1], [0], [0], [1], [0, 0, 1, 1], [], []>} : vector<16x16xbf16>, vector<16x128xbf16>, vector<16x128xf32> -> vector<16x128xf32>
    %370 = vector.broadcast %4 : vector<1x128xf32> to vector<16x128xf32>
    %371 = arith.addf %369, %370 : vector<16x128xf32>
    %c0_126 = arith.constant 0 : index
    %c0_127 = arith.constant 0 : index
    %372 = vector.load %arg9[%c0_126, %c0_127] : memref<16x128xf32, #tpu.memory_space<vmem>>, vector<16x128xf32>
    tpu.vector_store %arg9[%c0_126, %c0_127], %371 {strides = array<i32>} : memref<16x128xf32, #tpu.memory_space<vmem>>, vector<16x128xf32>,
    return
  }
}

</mosaic_0001>

<llo_original>
// kernel: xlnet_forward_core.1
$region0: #{xlnet_forward_core.1}
  #allocation0 [shape = 'u32[]', space=smem, size = 0x4, offset = 0x4, fixed_abs, tag = 'smem constant byte address 0x4 - core index']
  #allocation1 [shape = 'u32[144,128]{1,0:T(1,128)}', space=vmem, size = 0x12000, scoped, tag = 'internal scratch']
  #allocation2 [shape = 'f32[64,16]{1,0:T(8,128)}', space=vmem, size = 0x8000, scoped, tag = 'scratch operand']
  %s0 = inlined_call_operand.vmem [shape: f32[16,32], index: 0, kind: input, shape index: {}]
  %s1 = inlined_call_operand.vmem [shape: f32[24,128], index: 1, kind: input, shape index: {}]
  %s2 = inlined_call_operand.vmem [shape: bf16[2,32,96], index: 2, kind: input, shape index: {}]
  %s3 = inlined_call_operand.vmem [shape: bf16[2,4,8,32], index: 3, kind: input, shape index: {}]
  %s4 = inlined_call_operand.vmem [shape: bf16[2,32,64], index: 4, kind: input, shape index: {}]
  %s5 = inlined_call_operand.vmem [shape: bf16[2,64,32], index: 5, kind: input, shape index: {}]
  %s6 = inlined_call_operand.vmem [shape: f32[2,8,64], index: 6, kind: input, shape index: {}]
  %s7 = inlined_call_operand.vmem [shape: bf16[32,16], index: 7, kind: input, shape index: {}]
  %s8 = inlined_call_operand.vmem [shape: bf16[16,128], index: 8, kind: input, shape index: {}]
  %s9 = inlined_call_operand.vmem [shape: f32[16,128], index: 9, kind: output, shape index: {}]
  %s10 = sld [smem:[#allocation0]]
  $region46: #{xlnet_forward_core.1} parent=0
    _
  %s12 = ssub.s32 1, %s10
  %s13 = scalar_select 0, %s12, %s10
  // Predicated region
  $region2: #{xlnet_forward_core.1} parent=0 // pred_check
    _
  $region3: #{xlnet_forward_core.1} parent=0 // pred_check_branch
    %15 = sbr.rel (0) target = $region5
  $region4: #{xlnet_forward_core.1} parent=0 // pred_region
    _
  $region5: #{xlnet_forward_core.1} parent=0 // pred_fallthru
    _
  // Predicated region
  $region6: #{xlnet_forward_core.1} parent=0 // pred_check
    _
  $region7: #{xlnet_forward_core.1} parent=0 // pred_check_branch
    %17 = sbr.rel (0) target = $region9
  $region8: #{xlnet_forward_core.1} parent=0 // pred_region
    _
  $region9: #{xlnet_forward_core.1} parent=0 // pred_fallthru
    _
  // Predicated region
  $region10: #{xlnet_forward_core.1} parent=0 // pred_check
    _
  $region11: #{xlnet_forward_core.1} parent=0 // pred_check_branch
    %19 = sbr.rel (0) target = $region13
  $region12: #{xlnet_forward_core.1} parent=0 // pred_region
    _
  $region13: #{xlnet_forward_core.1} parent=0 // pred_fallthru
    _
  // Predicated region
  $region14: #{xlnet_forward_core.1} parent=0 // pred_check
    _
  $region15: #{xlnet_forward_core.1} parent=0 // pred_check_branch
    %21 = sbr.rel (0) target = $region17
  $region16: #{xlnet_forward_core.1} parent=0 // pred_region
    _
  $region17: #{xlnet_forward_core.1} parent=0 // pred_fallthru
    _
  // Predicated region
  $region18: #{xlnet_forward_core.1} parent=0 // pred_check
    _
  $region19: #{xlnet_forward_core.1} parent=0 // pred_check_branch
    %23 = sbr.rel (0) target = $region21
  $region20: #{xlnet_forward_core.1} parent=0 // pred_region
    _
  $region21: #{xlnet_forward_core.1} parent=0 // pred_fallthru
    _
  // Predicated region
  $region22: #{xlnet_forward_core.1} parent=0 // pred_check
    _
  $region23: #{xlnet_forward_core.1} parent=0 // pred_check_branch
    %25 = sbr.rel (0) target = $region25
  $region24: #{xlnet_forward_core.1} parent=0 // pred_region
    _
  $region25: #{xlnet_forward_core.1} parent=0 // pred_fallthru
    _
  // Predicated region
  $region26: #{xlnet_forward_core.1} parent=0 // pred_check
    _
  $region27: #{xlnet_forward_core.1} parent=0 // pred_check_branch
    %27 = sbr.rel (0) target = $region29
  $region28: #{xlnet_forward_core.1} parent=0 // pred_region
    _
  $region29: #{xlnet_forward_core.1} parent=0 // pred_fallthru
    _
  // Predicated region
  $region30: #{xlnet_forward_core.1} parent=0 // pred_check
    _
  $region31: #{xlnet_forward_core.1} parent=0 // pred_check_branch
    %29 = sbr.rel (0) target = $region33
  $region32: #{xlnet_forward_core.1} parent=0 // pred_region
    _
  $region33: #{xlnet_forward_core.1} parent=0 // pred_fallthru
    _
  // Predicated region
  $region34: #{xlnet_forward_core.1} parent=0 // pred_check
    _
  $region35: #{xlnet_forward_core.1} parent=0 // pred_check_branch
    %31 = sbr.rel (0) target = $region37
  $region36: #{xlnet_forward_core.1} parent=0 // pred_region
    _
  $region37: #{xlnet_forward_core.1} parent=0 // pred_fallthru
    _
  %v33 = vld [vmem:[%s0] sm:$0xff]
  %v34 = vld [vmem:[%s0 + $0x8] sm:$0xff]
  %v35 = vld [vmem:[%s1] sm:$0xff]
  %v36 = vld [vmem:[%s1 + $0x8] sm:$0xff]
  %v37 = vld [vmem:[%s1 + $0x10] sm:$0xff]
  %v38 = vld [vmem:[%s2] sm:$0xf]
  %v39 = vld [vmem:[%s2 + $0x4] sm:$0xf]
  %v40 = vld [vmem:[%s2 + $0x8] sm:$0xf]
  %v41 = vld [vmem:[%s2 + $0xc] sm:$0xf]
  %v42 = vld [vmem:[%s3] sm:$0xf]
  %v43 = vld [vmem:[%s3 + $0x4] sm:$0xf]
  %v44 = vld [vmem:[%s3 + $0x8] sm:$0xf]
  %v45 = vld [vmem:[%s3 + $0xc] sm:$0xf]
  %v46 = vld [vmem:[%s4] sm:$0xf]
  %v47 = vld [vmem:[%s4 + $0x4] sm:$0xf]
  %v48 = vld [vmem:[%s4 + $0x8] sm:$0xf]
  %v49 = vld [vmem:[%s4 + $0xc] sm:$0xf]
  %v50 = vld [vmem:[%s5] sm:$0xf]
  %v51 = vld [vmem:[%s5 + $0x4] sm:$0xf]
  %v52 = vld [vmem:[%s5 + $0x8] sm:$0xf]
  %v53 = vld [vmem:[%s5 + $0xc] sm:$0xf]
  %v54 = vld [vmem:[%s5 + $0x10] sm:$0xf]
  %v55 = vld [vmem:[%s5 + $0x14] sm:$0xf]
  %v56 = vld [vmem:[%s5 + $0x18] sm:$0xf]
  %v57 = vld [vmem:[%s5 + $0x1c] sm:$0xf]
  %v58 = vld [vmem:[%s6] sm:$0xff]
  %v59 = vpack.c.bf16 %v34, %v33
  %v64 = vunpack.c.l.b16 %v38
  %v65 = vunpack.c.l.b16 %v39
  %v66 = vunpack.c.l.b16 %v40
  %v67 = vunpack.c.l.b16 %v41
  %v68 = vpack.c.b16 %v65, %v64
  %v69 = vpack.c.b16 %v67, %v66
  %vm72 = vcmask 261120
  %v74 = vsel %vm72, %v59, 0
  %76 = vmatprep.subr.bf16.mxu0 0
  %77 = vmatpush1.bf16.msra.mxu0 %v68
  %78 = vmatprep.subr.bf16.mxu0 0
  %79 = vmatpush1.bf16.msra.mxu0 %v69
  %80 = vmatprep.subr.bf16.mxu0 0
  %81 = vmatpush1.bf16.msra.mxu0 0
  %82 = vmatprep.subr.bf16.mxu0 0
  %83 = vmatpush1.bf16.msra.mxu0 0
  %84 = vmatprep.subr.bf16.mxu0 0
  %85 = vmatpush1.bf16.msra.mxu0 0
  %86 = vmatprep.subr.bf16.mxu0 0
  %87 = vmatpush1.bf16.msra.mxu0 0
  %88 = vmatprep.subr.bf16.mxu0 0
  %89 = vmatpush1.bf16.msra.mxu0 0
  %90 = vmatprep.subr.bf16.mxu0 0
  %91 = vmatpush1.bf16.msra.mxu0 0
  %92 = vmatprep.subr.bf16.mxu0 0
  %93 = vmatpush1.bf16.msra.mxu0 0
  %94 = vmatprep.subr.bf16.mxu0 0
  %95 = vmatpush1.bf16.msra.mxu0 0
  %96 = vmatprep.subr.bf16.mxu0 0
  %97 = vmatpush1.bf16.msra.mxu0 0
  %98 = vmatprep.subr.bf16.mxu0 0
  %99 = vmatpush1.bf16.msra.mxu0 0
  %100 = vmatprep.subr.bf16.mxu0 0
  %101 = vmatpush1.bf16.msra.mxu0 0
  %102 = vmatprep.subr.bf16.mxu0 0
  %103 = vmatpush1.bf16.msra.mxu0 0
  %104 = vmatprep.subr.bf16.mxu0 0
  %105 = vmatpush1.bf16.msra.mxu0 0
  %106 = vmatprep.subr.bf16.mxu0 0
  %107 = vmatpush1.bf16.msra.mxu0 0
  %108 = vmatprep.mubr.bf16.mxu0 0
  %109 = vmatmul.mubr.bf16.gmra.mrb[0].mxu0 %v74
  %v110 = vpop.f32.mrb[0].mxu0
  %v111 = vadd.f32 0.0, %v110
  %v112 = vpop.f32.mrb[0].mxu0
  %v113 = vpop.f32.mrb[0].mxu0
  %v114 = vadd.f32 0.0, %v113
  %v115 = vpop.f32.mrb[0].mxu0
  %116 = vdwg.mxu0
  %v117 = vpack.c.bf16 %v114, %v111
  %119 = vrot.lane.b32.xlu0 %v117, 96
  %v120 = vpop.permute.xlu0 %119
  %vm121 = vcmask 64512
  %v123 = vsel %vm121, %v117, 0
  %v126 = vsel %vm121, %v120, 0
  %128 = vmatprep.subr.bf16.mxu0 0
  %129 = vmatpush1.bf16.xpose.msra.mxu0 %v126
  %130 = vmatprep.subr.bf16.mxu0 0
  %131 = vmatpush1.bf16.xpose.msra.mxu0 0
  %132 = vmatprep.subr.bf16.mxu0 0
  %133 = vmatpush1.bf16.xpose.msra.mxu0 0
  %134 = vmatprep.subr.bf16.mxu0 0
  %135 = vmatpush1.bf16.xpose.msra.mxu0 0
  %136 = vmatprep.subr.bf16.mxu0 0
  %137 = vmatpush1.bf16.xpose.msra.mxu0 0
  %138 = vmatprep.subr.bf16.mxu0 0
  %139 = vmatpush1.bf16.xpose.msra.mxu0 0
  %140 = vmatprep.subr.bf16.mxu0 0
  %141 = vmatpush1.bf16.xpose.msra.mxu0 0
  %142 = vmatprep.subr.bf16.mxu0 0
  %143 = vmatpush1.bf16.xpose.msra.mxu0 0
  %144 = vmatprep.subr.bf16.mxu0 0
  %145 = vmatpush1.bf16.xpose.msra.mxu0 0
  %146 = vmatprep.subr.bf16.mxu0 0
  %147 = vmatpush1.bf16.xpose.msra.mxu0 0
  %148 = vmatprep.subr.bf16.mxu0 0
  %149 = vmatpush1.bf16.xpose.msra.mxu0 0
  %150 = vmatprep.subr.bf16.mxu0 0
  %151 = vmatpush1.bf16.xpose.msra.mxu0 0
  %152 = vmatprep.subr.bf16.mxu0 0
  %153 = vmatpush1.bf16.xpose.msra.mxu0 0
  %154 = vmatprep.subr.bf16.mxu0 0
  %155 = vmatpush1.bf16.xpose.msra.mxu0 0
  %156 = vmatprep.subr.bf16.mxu0 0
  %157 = vmatpush1.bf16.xpose.msra.mxu0 0
  %158 = vmatprep.subr.bf16.mxu0 0
  %159 = vmatpush1.bf16.xpose.msra.mxu0 0
  %160 = vmatprep.mubr.bf16.mxu0 0
  %161 = vmatmul.mubr.bf16.gmra.mrb[0].mxu0 %v123
  %v162 = vpop.f32.mrb[0].mxu0
  %v163 = vadd.f32 0.0, %v162
  %v164 = vpop.f32.mrb[0].mxu0
  %v165 = vpop.f32.mrb[0].mxu0
  %v166 = vadd.f32 0.0, %v165
  %v167 = vpop.f32.mrb[0].mxu0
  %168 = vdwg.mxu0
  %v169 = vmul.f32 %v163, 0.35355338
  %v170 = vmul.f32 %v166, 0.35355338
  %v171 = vadd.f32 %v169, %v35
  %v172 = vadd.f32 %v170, %v36
  %vm173 = vcmask 130048
  %174 = vst.msk [vmem:[#allocation2] sm:$0xff] %vm173, %v171
  %175 = vst.msk [vmem:[#allocation2 + $0x8] sm:$0xff] %vm173, %v172
  %176 = vrot.lane.b32.xlu0 %v117, 120
  %v177 = vpop.permute.xlu0 %176
  %178 = vrot.lane.b32.xlu0 %v117, 88
  %v179 = vpop.permute.xlu0 %178
  %v181 = vsel %vm121, %v177, 0
  %v184 = vsel %vm121, %v179, 0
  %186 = vmatprep.subr.bf16.mxu0 0
  %187 = vmatpush1.bf16.xpose.msra.mxu0 %v184
  %188 = vmatprep.subr.bf16.mxu0 0
  %189 = vmatpush1.bf16.xpose.msra.mxu0 0
  %190 = vmatprep.subr.bf16.mxu0 0
  %191 = vmatpush1.bf16.xpose.msra.mxu0 0
  %192 = vmatprep.subr.bf16.mxu0 0
  %193 = vmatpush1.bf16.xpose.msra.mxu0 0
  %194 = vmatprep.subr.bf16.mxu0 0
  %195 = vmatpush1.bf16.xpose.msra.mxu0 0
  %196 = vmatprep.subr.bf16.mxu0 0
  %197 = vmatpush1.bf16.xpose.msra.mxu0 0
  %198 = vmatprep.subr.bf16.mxu0 0
  %199 = vmatpush1.bf16.xpose.msra.mxu0 0
  %200 = vmatprep.subr.bf16.mxu0 0
  %201 = vmatpush1.bf16.xpose.msra.mxu0 0
  %202 = vmatprep.subr.bf16.mxu0 0
  %203 = vmatpush1.bf16.xpose.msra.mxu0 0
  %204 = vmatprep.subr.bf16.mxu0 0
  %205 = vmatpush1.bf16.xpose.msra.mxu0 0
  %206 = vmatprep.subr.bf16.mxu0 0
  %207 = vmatpush1.bf16.xpose.msra.mxu0 0
  %208 = vmatprep.subr.bf16.mxu0 0
  %209 = vmatpush1.bf16.xpose.msra.mxu0 0
  %210 = vmatprep.subr.bf16.mxu0 0
  %211 = vmatpush1.bf16.xpose.msra.mxu0 0
  %212 = vmatprep.subr.bf16.mxu0 0
  %213 = vmatpush1.bf16.xpose.msra.mxu0 0
  %214 = vmatprep.subr.bf16.mxu0 0
  %215 = vmatpush1.bf16.xpose.msra.mxu0 0
  %216 = vmatprep.subr.bf16.mxu0 0
  %217 = vmatpush1.bf16.xpose.msra.mxu0 0
  %218 = vmatprep.mubr.bf16.mxu0 0
  %219 = vmatmul.mubr.bf16.gmra.mrb[0].mxu0 %v181
  %v220 = vpop.f32.mrb[0].mxu0
  %v221 = vadd.f32 0.0, %v220
  %v222 = vpop.f32.mrb[0].mxu0
  %v223 = vpop.f32.mrb[0].mxu0
  %v224 = vadd.f32 0.0, %v223
  %v225 = vpop.f32.mrb[0].mxu0
  %226 = vdwg.mxu0
  %v227 = vmul.f32 %v221, 0.35355338
  %v228 = vmul.f32 %v224, 0.35355338
  %v229 = vadd.f32 %v227, %v35
  %v230 = vadd.f32 %v228, %v36
  %231 = vst.msk [vmem:[#allocation2 + $0x10] sm:$0xff] %vm173, %v229
  %232 = vst.msk [vmem:[#allocation2 + $0x18] sm:$0xff] %vm173, %v230
  %233 = vrot.lane.b32.xlu0 %v117, 112
  %v234 = vpop.permute.xlu0 %233
  %235 = vrot.lane.b32.xlu0 %v117, 80
  %v236 = vpop.permute.xlu0 %235
  %v238 = vsel %vm121, %v234, 0
  %v241 = vsel %vm121, %v236, 0
  %243 = vmatprep.subr.bf16.mxu0 0
  %244 = vmatpush1.bf16.xpose.msra.mxu0 %v241
  %245 = vmatprep.subr.bf16.mxu0 0
  %246 = vmatpush1.bf16.xpose.msra.mxu0 0
  %247 = vmatprep.subr.bf16.mxu0 0
  %248 = vmatpush1.bf16.xpose.msra.mxu0 0
  %249 = vmatprep.subr.bf16.mxu0 0
  %250 = vmatpush1.bf16.xpose.msra.mxu0 0
  %251 = vmatprep.subr.bf16.mxu0 0
  %252 = vmatpush1.bf16.xpose.msra.mxu0 0
  %253 = vmatprep.subr.bf16.mxu0 0
  %254 = vmatpush1.bf16.xpose.msra.mxu0 0
  %255 = vmatprep.subr.bf16.mxu0 0
  %256 = vmatpush1.bf16.xpose.msra.mxu0 0
  %257 = vmatprep.subr.bf16.mxu0 0
  %258 = vmatpush1.bf16.xpose.msra.mxu0 0
  %259 = vmatprep.subr.bf16.mxu0 0
  %260 = vmatpush1.bf16.xpose.msra.mxu0 0
  %261 = vmatprep.subr.bf16.mxu0 0
  %262 = vmatpush1.bf16.xpose.msra.mxu0 0
  %263 = vmatprep.subr.bf16.mxu0 0
  %264 = vmatpush1.bf16.xpose.msra.mxu0 0
  %265 = vmatprep.subr.bf16.mxu0 0
  %266 = vmatpush1.bf16.xpose.msra.mxu0 0
  %267 = vmatprep.subr.bf16.mxu0 0
  %268 = vmatpush1.bf16.xpose.msra.mxu0 0
  %269 = vmatprep.subr.bf16.mxu0 0
  %270 = vmatpush1.bf16.xpose.msra.mxu0 0
  %271 = vmatprep.subr.bf16.mxu0 0
  %272 = vmatpush1.bf16.xpose.msra.mxu0 0
  %273 = vmatprep.subr.bf16.mxu0 0
  %274 = vmatpush1.bf16.xpose.msra.mxu0 0
  %275 = vmatprep.mubr.bf16.mxu0 0
  %276 = vmatmul.mubr.bf16.gmra.mrb[0].mxu0 %v238
  %v277 = vpop.f32.mrb[0].mxu0
  %v278 = vadd.f32 0.0, %v277
  %v279 = vpop.f32.mrb[0].mxu0
  %v280 = vpop.f32.mrb[0].mxu0
  %v281 = vadd.f32 0.0, %v280
  %v282 = vpop.f32.mrb[0].mxu0
  %283 = vdwg.mxu0
  %v284 = vmul.f32 %v278, 0.35355338
  %v285 = vmul.f32 %v281, 0.35355338
  %v286 = vadd.f32 %v284, %v35
  %v287 = vadd.f32 %v285, %v36
  %288 = vst.msk [vmem:[#allocation2 + $0x20] sm:$0xff] %vm173, %v286
  %289 = vst.msk [vmem:[#allocation2 + $0x28] sm:$0xff] %vm173, %v287
  %290 = vrot.lane.b32.xlu0 %v117, 104
  %v291 = vpop.permute.xlu0 %290
  %292 = vrot.lane.b32.xlu0 %v117, 72
  %v293 = vpop.permute.xlu0 %292
  %v295 = vsel %vm121, %v291, 0
  %v298 = vsel %vm121, %v293, 0
  %300 = vmatprep.subr.bf16.mxu0 0
  %301 = vmatpush1.bf16.xpose.msra.mxu0 %v298
  %302 = vmatprep.subr.bf16.mxu0 0
  %303 = vmatpush1.bf16.xpose.msra.mxu0 0
  %304 = vmatprep.subr.bf16.mxu0 0
  %305 = vmatpush1.bf16.xpose.msra.mxu0 0
  %306 = vmatprep.subr.bf16.mxu0 0
  %307 = vmatpush1.bf16.xpose.msra.mxu0 0
  %308 = vmatprep.subr.bf16.mxu0 0
  %309 = vmatpush1.bf16.xpose.msra.mxu0 0
  %310 = vmatprep.subr.bf16.mxu0 0
  %311 = vmatpush1.bf16.xpose.msra.mxu0 0
  %312 = vmatprep.subr.bf16.mxu0 0
  %313 = vmatpush1.bf16.xpose.msra.mxu0 0
  %314 = vmatprep.subr.bf16.mxu0 0
  %315 = vmatpush1.bf16.xpose.msra.mxu0 0
  %316 = vmatprep.subr.bf16.mxu0 0
  %317 = vmatpush1.bf16.xpose.msra.mxu0 0
  %318 = vmatprep.subr.bf16.mxu0 0
  %319 = vmatpush1.bf16.xpose.msra.mxu0 0
  %320 = vmatprep.subr.bf16.mxu0 0
  %321 = vmatpush1.bf16.xpose.msra.mxu0 0
  %322 = vmatprep.subr.bf16.mxu0 0
  %323 = vmatpush1.bf16.xpose.msra.mxu0 0
  %324 = vmatprep.subr.bf16.mxu0 0
  %325 = vmatpush1.bf16.xpose.msra.mxu0 0
  %326 = vmatprep.subr.bf16.mxu0 0
  %327 = vmatpush1.bf16.xpose.msra.mxu0 0
  %328 = vmatprep.subr.bf16.mxu0 0
  %329 = vmatpush1.bf16.xpose.msra.mxu0 0
  %330 = vmatprep.subr.bf16.mxu0 0
  %331 = vmatpush1.bf16.xpose.msra.mxu0 0
  %332 = vmatprep.mubr.bf16.mxu0 0
  %333 = vmatmul.mubr.bf16.gmra.mrb[0].mxu0 %v295
  %v334 = vpop.f32.mrb[0].mxu0
  %v335 = vadd.f32 0.0, %v334
  %v336 = vpop.f32.mrb[0].mxu0
  %v337 = vpop.f32.mrb[0].mxu0
  %v338 = vadd.f32 0.0, %v337
  %v339 = vpop.f32.mrb[0].mxu0
  %340 = vdwg.mxu0
  %v341 = vmul.f32 %v335, 0.35355338
  %v342 = vmul.f32 %v338, 0.35355338
  %v343 = vadd.f32 %v341, %v35
  %v344 = vadd.f32 %v342, %v36
  %345 = vst.msk [vmem:[#allocation2 + $0x30] sm:$0xff] %vm173, %v343
  %346 = vst.msk [vmem:[#allocation2 + $0x38] sm:$0xff] %vm173, %v344
  %v347 = vld [vmem:[#allocation2] sm:$0xff]
  %v348 = vld [vmem:[#allocation2 + $0x8] sm:$0xff]
  %v349 = vld [vmem:[#allocation2 + $0x10] sm:$0xff]
  %v350 = vld [vmem:[#allocation2 + $0x18] sm:$0xff]
  %v351 = vld [vmem:[#allocation2 + $0x20] sm:$0xff]
  %v352 = vld [vmem:[#allocation2 + $0x28] sm:$0xff]
  %v353 = vld [vmem:[#allocation2 + $0x30] sm:$0xff]
  %v354 = vld [vmem:[#allocation2 + $0x38] sm:$0xff]
  %v355 = vsel %vm173, %v347, -inf
  %356 = vmax.xlane.f32.xlu0 %v355
  %v357 = vpop.xlane.xlu0 %356
  %v358 = vsel %vm173, %v348, -inf
  %359 = vmax.xlane.f32.xlu0 %v358
  %v360 = vpop.xlane.xlu0 %359
  %v361 = vsel %vm173, %v349, -inf
  %362 = vmax.xlane.f32.xlu0 %v361
  %v363 = vpop.xlane.xlu0 %362
  %v364 = vsel %vm173, %v350, -inf
  %365 = vmax.xlane.f32.xlu0 %v364
  %v366 = vpop.xlane.xlu0 %365
  %v367 = vsel %vm173, %v351, -inf
  %368 = vmax.xlane.f32.xlu0 %v367
  %v369 = vpop.xlane.xlu0 %368
  %v370 = vsel %vm173, %v352, -inf
  %371 = vmax.xlane.f32.xlu0 %v370
  %v372 = vpop.xlane.xlu0 %371
  %v373 = vsel %vm173, %v353, -inf
  %374 = vmax.xlane.f32.xlu0 %v373
  %v375 = vpop.xlane.xlu0 %374
  %v376 = vsel %vm173, %v354, -inf
  %377 = vmax.xlane.f32.xlu0 %v376
  %v378 = vpop.xlane.xlu0 %377
  %v379 = vsub.f32 %v347, %v357
  %v380 = vsub.f32 %v348, %v360
  %v381 = vsub.f32 %v349, %v363
  %v382 = vsub.f32 %v350, %v366
  %v383 = vsub.f32 %v351, %v369
  %v384 = vsub.f32 %v352, %v372
  %v385 = vsub.f32 %v353, %v375
  %v386 = vsub.f32 %v354, %v378
  %v387 = vmul.f32 %v379, 1.442695
  %v388 = vpow.pop %v387
  %v389 = vmul.f32 %v380, 1.442695
  %v390 = vpow.pop %v389
  %v391 = vmul.f32 %v381, 1.442695
  %v392 = vpow.pop %v391
  %v393 = vmul.f32 %v382, 1.442695
  %v394 = vpow.pop %v393
  %v395 = vmul.f32 %v383, 1.442695
  %v396 = vpow.pop %v395
  %v397 = vmul.f32 %v384, 1.442695
  %v398 = vpow.pop %v397
  %v399 = vmul.f32 %v385, 1.442695
  %v400 = vpow.pop %v399
  %v401 = vmul.f32 %v386, 1.442695
  %v402 = vpow.pop %v401
  %v403 = vsel %vm173, %v388, 0.0
  %404 = vadd.xlane.f32.xlu0 %v403
  %v405 = vpop.xlane.xlu0 %404
  %v406 = vsel %vm173, %v390, 0.0
  %407 = vadd.xlane.f32.xlu0 %v406
  %v408 = vpop.xlane.xlu0 %407
  %v409 = vsel %vm173, %v392, 0.0
  %410 = vadd.xlane.f32.xlu0 %v409
  %v411 = vpop.xlane.xlu0 %410
  %v412 = vsel %vm173, %v394, 0.0
  %413 = vadd.xlane.f32.xlu0 %v412
  %v414 = vpop.xlane.xlu0 %413
  %v415 = vsel %vm173, %v396, 0.0
  %416 = vadd.xlane.f32.xlu0 %v415
  %v417 = vpop.xlane.xlu0 %416
  %v418 = vsel %vm173, %v398, 0.0
  %419 = vadd.xlane.f32.xlu0 %v418
  %v420 = vpop.xlane.xlu0 %419
  %v421 = vsel %vm173, %v400, 0.0
  %422 = vadd.xlane.f32.xlu0 %v421
  %v423 = vpop.xlane.xlu0 %422
  %v424 = vsel %vm173, %v402, 0.0
  %425 = vadd.xlane.f32.xlu0 %v424
  %v426 = vpop.xlane.xlu0 %425
  %v427 = vrcp.pop %v405
  %v428 = vrcp.pop %v408
  %v429 = vrcp.pop %v411
  %v430 = vrcp.pop %v414
  %v431 = vrcp.pop %v417
  %v432 = vrcp.pop %v420
  %v433 = vrcp.pop %v423
  %v434 = vrcp.pop %v426
  %v435 = vmul.f32 %v388, %v427
  %v436 = vmul.f32 %v390, %v428
  %v437 = vmul.f32 %v392, %v429
  %v438 = vmul.f32 %v394, %v430
  %v439 = vmul.f32 %v396, %v431
  %v440 = vmul.f32 %v398, %v432
  %v441 = vmul.f32 %v400, %v433
  %v442 = vmul.f32 %v402, %v434
  %v443 = vpack.c.bf16 %v436, %v435
  %444 = vrot.lane.b32.xlu0 %v117, 64
  %v445 = vpop.permute.xlu0 %444
  %v448 = vsel %vm173, %v443, 0
  %450 = vmatprep.subr.bf16.mxu0 0
  %451 = vmatpush1.bf16.msra.mxu0 %v445
  %452 = vmatprep.subr.bf16.mxu0 0
  %453 = vmatpush1.bf16.msra.mxu0 0
  %454 = vmatprep.subr.bf16.mxu0 0
  %455 = vmatpush1.bf16.msra.mxu0 0
  %456 = vmatprep.subr.bf16.mxu0 0
  %457 = vmatpush1.bf16.msra.mxu0 0
  %458 = vmatprep.subr.bf16.mxu0 0
  %459 = vmatpush1.bf16.msra.mxu0 0
  %460 = vmatprep.subr.bf16.mxu0 0
  %461 = vmatpush1.bf16.msra.mxu0 0
  %462 = vmatprep.subr.bf16.mxu0 0
  %463 = vmatpush1.bf16.msra.mxu0 0
  %464 = vmatprep.subr.bf16.mxu0 0
  %465 = vmatpush1.bf16.msra.mxu0 0
  %466 = vmatprep.subr.bf16.mxu0 0
  %467 = vmatpush1.bf16.msra.mxu0 0
  %468 = vmatprep.subr.bf16.mxu0 0
  %469 = vmatpush1.bf16.msra.mxu0 0
  %470 = vmatprep.subr.bf16.mxu0 0
  %471 = vmatpush1.bf16.msra.mxu0 0
  %472 = vmatprep.subr.bf16.mxu0 0
  %473 = vmatpush1.bf16.msra.mxu0 0
  %474 = vmatprep.subr.bf16.mxu0 0
  %475 = vmatpush1.bf16.msra.mxu0 0
  %476 = vmatprep.subr.bf16.mxu0 0
  %477 = vmatpush1.bf16.msra.mxu0 0
  %478 = vmatprep.subr.bf16.mxu0 0
  %479 = vmatpush1.bf16.msra.mxu0 0
  %480 = vmatprep.subr.bf16.mxu0 0
  %481 = vmatpush1.bf16.msra.mxu0 0
  %482 = vmatprep.mubr.bf16.mxu0 0
  %483 = vmatmul.mubr.bf16.gmra.mrb[0].mxu0 %v448
  %v484 = vpop.f32.mrb[0].mxu0
  %v485 = vadd.f32 0.0, %v484
  %v486 = vpop.f32.mrb[0].mxu0
  %v487 = vpop.f32.mrb[0].mxu0
  %v488 = vadd.f32 0.0, %v487
  %v489 = vpop.f32.mrb[0].mxu0
  %490 = vdwg.mxu0
  %v491 = vpack.c.bf16 %v488, %v485
  %v492 = vpack.c.bf16 %v438, %v437
  %493 = vrot.lane.b32.xlu0 %v117, 56
  %v494 = vpop.permute.xlu0 %493
  %v497 = vsel %vm173, %v492, 0
  %499 = vmatprep.subr.bf16.mxu0 0
  %500 = vmatpush1.bf16.msra.mxu0 %v494
  %501 = vmatprep.subr.bf16.mxu0 0
  %502 = vmatpush1.bf16.msra.mxu0 0
  %503 = vmatprep.subr.bf16.mxu0 0
  %504 = vmatpush1.bf16.msra.mxu0 0
  %505 = vmatprep.subr.bf16.mxu0 0
  %506 = vmatpush1.bf16.msra.mxu0 0
  %507 = vmatprep.subr.bf16.mxu0 0
  %508 = vmatpush1.bf16.msra.mxu0 0
  %509 = vmatprep.subr.bf16.mxu0 0
  %510 = vmatpush1.bf16.msra.mxu0 0
  %511 = vmatprep.subr.bf16.mxu0 0
  %512 = vmatpush1.bf16.msra.mxu0 0
  %513 = vmatprep.subr.bf16.mxu0 0
  %514 = vmatpush1.bf16.msra.mxu0 0
  %515 = vmatprep.subr.bf16.mxu0 0
  %516 = vmatpush1.bf16.msra.mxu0 0
  %517 = vmatprep.subr.bf16.mxu0 0
  %518 = vmatpush1.bf16.msra.mxu0 0
  %519 = vmatprep.subr.bf16.mxu0 0
  %520 = vmatpush1.bf16.msra.mxu0 0
  %521 = vmatprep.subr.bf16.mxu0 0
  %522 = vmatpush1.bf16.msra.mxu0 0
  %523 = vmatprep.subr.bf16.mxu0 0
  %524 = vmatpush1.bf16.msra.mxu0 0
  %525 = vmatprep.subr.bf16.mxu0 0
  %526 = vmatpush1.bf16.msra.mxu0 0
  %527 = vmatprep.subr.bf16.mxu0 0
  %528 = vmatpush1.bf16.msra.mxu0 0
  %529 = vmatprep.subr.bf16.mxu0 0
  %530 = vmatpush1.bf16.msra.mxu0 0
  %531 = vmatprep.mubr.bf16.mxu0 0
  %532 = vmatmul.mubr.bf16.gmra.mrb[0].mxu0 %v497
  %v533 = vpop.f32.mrb[0].mxu0
  %v534 = vadd.f32 0.0, %v533
  %v535 = vpop.f32.mrb[0].mxu0
  %v536 = vpop.f32.mrb[0].mxu0
  %v537 = vadd.f32 0.0, %v536
  %v538 = vpop.f32.mrb[0].mxu0
  %539 = vdwg.mxu0
  %v540 = vpack.c.bf16 %v537, %v534
  %v542 = vsel %vm121, %v540, 0
  %vm544 = vcmask 1043456
  %v546 = vsel %vm544, %v43, 0
  %548 = vmatprep.subr.bf16.mxu0 0
  %549 = vmatpush1.bf16.msra.mxu0 %v546
  %550 = vmatprep.subr.bf16.mxu0 0
  %551 = vmatpush1.bf16.msra.mxu0 0
  %552 = vmatprep.subr.bf16.mxu0 0
  %553 = vmatpush1.bf16.msra.mxu0 0
  %554 = vmatprep.subr.bf16.mxu0 0
  %555 = vmatpush1.bf16.msra.mxu0 0
  %556 = vmatprep.subr.bf16.mxu0 0
  %557 = vmatpush1.bf16.msra.mxu0 0
  %558 = vmatprep.subr.bf16.mxu0 0
  %559 = vmatpush1.bf16.msra.mxu0 0
  %560 = vmatprep.subr.bf16.mxu0 0
  %561 = vmatpush1.bf16.msra.mxu0 0
  %562 = vmatprep.subr.bf16.mxu0 0
  %563 = vmatpush1.bf16.msra.mxu0 0
  %564 = vmatprep.subr.bf16.mxu0 0
  %565 = vmatpush1.bf16.msra.mxu0 0
  %566 = vmatprep.subr.bf16.mxu0 0
  %567 = vmatpush1.bf16.msra.mxu0 0
  %568 = vmatprep.subr.bf16.mxu0 0
  %569 = vmatpush1.bf16.msra.mxu0 0
  %570 = vmatprep.subr.bf16.mxu0 0
  %571 = vmatpush1.bf16.msra.mxu0 0
  %572 = vmatprep.subr.bf16.mxu0 0
  %573 = vmatpush1.bf16.msra.mxu0 0
  %574 = vmatprep.subr.bf16.mxu0 0
  %575 = vmatpush1.bf16.msra.mxu0 0
  %576 = vmatprep.subr.bf16.mxu0 0
  %577 = vmatpush1.bf16.msra.mxu0 0
  %578 = vmatprep.subr.bf16.mxu0 0
  %579 = vmatpush1.bf16.msra.mxu0 0
  %580 = vmatprep.mubr.bf16.mxu0 0
  %581 = vmatmul.mubr.bf16.gmra.mrb[0].mxu0 %v542
  %v582 = vpop.f32.mrb[0].mxu0
  %v583 = vadd.f32 0.0, %v582
  %v584 = vpop.f32.mrb[0].mxu0
  %v585 = vpop.f32.mrb[0].mxu0
  %v586 = vadd.f32 0.0, %v585
  %v587 = vpop.f32.mrb[0].mxu0
  %588 = vdwg.mxu0
  %v590 = vsel %vm121, %v491, 0
  %v593 = vsel %vm544, %v42, 0
  %595 = vmatprep.subr.bf16.mxu0 0
  %596 = vmatpush1.bf16.msra.mxu0 %v593
  %597 = vmatprep.subr.bf16.mxu0 0
  %598 = vmatpush1.bf16.msra.mxu0 0
  %599 = vmatprep.subr.bf16.mxu0 0
  %600 = vmatpush1.bf16.msra.mxu0 0
  %601 = vmatprep.subr.bf16.mxu0 0
  %602 = vmatpush1.bf16.msra.mxu0 0
  %603 = vmatprep.subr.bf16.mxu0 0
  %604 = vmatpush1.bf16.msra.mxu0 0
  %605 = vmatprep.subr.bf16.mxu0 0
  %606 = vmatpush1.bf16.msra.mxu0 0
  %607 = vmatprep.subr.bf16.mxu0 0
  %608 = vmatpush1.bf16.msra.mxu0 0
  %609 = vmatprep.subr.bf16.mxu0 0
  %610 = vmatpush1.bf16.msra.mxu0 0
  %611 = vmatprep.subr.bf16.mxu0 0
  %612 = vmatpush1.bf16.msra.mxu0 0
  %613 = vmatprep.subr.bf16.mxu0 0
  %614 = vmatpush1.bf16.msra.mxu0 0
  %615 = vmatprep.subr.bf16.mxu0 0
  %616 = vmatpush1.bf16.msra.mxu0 0
  %617 = vmatprep.subr.bf16.mxu0 0
  %618 = vmatpush1.bf16.msra.mxu0 0
  %619 = vmatprep.subr.bf16.mxu0 0
  %620 = vmatpush1.bf16.msra.mxu0 0
  %621 = vmatprep.subr.bf16.mxu0 0
  %622 = vmatpush1.bf16.msra.mxu0 0
  %623 = vmatprep.subr.bf16.mxu0 0
  %624 = vmatpush1.bf16.msra.mxu0 0
  %625 = vmatprep.subr.bf16.mxu0 0
  %626 = vmatpush1.bf16.msra.mxu0 0
  %627 = vmatprep.mubr.bf16.mxu0 0
  %628 = vmatmul.mubr.bf16.gmra.mrb[0].mxu0 %v590
  %v629 = vpop.f32.mrb[0].mxu0
  %v630 = vadd.f32 %v583, %v629
  %v631 = vpop.f32.mrb[0].mxu0
  %v632 = vpop.f32.mrb[0].mxu0
  %v633 = vadd.f32 %v586, %v632
  %v634 = vpop.f32.mrb[0].mxu0
  %635 = vdwg.mxu0
  %v636 = vpack.c.bf16 %v440, %v439
  %637 = vrot.lane.b32.xlu0 %v117, 48
  %v638 = vpop.permute.xlu0 %637
  %v641 = vsel %vm173, %v636, 0
  %643 = vmatprep.subr.bf16.mxu0 0
  %644 = vmatpush1.bf16.msra.mxu0 %v638
  %645 = vmatprep.subr.bf16.mxu0 0
  %646 = vmatpush1.bf16.msra.mxu0 0
  %647 = vmatprep.subr.bf16.mxu0 0
  %648 = vmatpush1.bf16.msra.mxu0 0
  %649 = vmatprep.subr.bf16.mxu0 0
  %650 = vmatpush1.bf16.msra.mxu0 0
  %651 = vmatprep.subr.bf16.mxu0 0
  %652 = vmatpush1.bf16.msra.mxu0 0
  %653 = vmatprep.subr.bf16.mxu0 0
  %654 = vmatpush1.bf16.msra.mxu0 0
  %655 = vmatprep.subr.bf16.mxu0 0
  %656 = vmatpush1.bf16.msra.mxu0 0
  %657 = vmatprep.subr.bf16.mxu0 0
  %658 = vmatpush1.bf16.msra.mxu0 0
  %659 = vmatprep.subr.bf16.mxu0 0
  %660 = vmatpush1.bf16.msra.mxu0 0
  %661 = vmatprep.subr.bf16.mxu0 0
  %662 = vmatpush1.bf16.msra.mxu0 0
  %663 = vmatprep.subr.bf16.mxu0 0
  %664 = vmatpush1.bf16.msra.mxu0 0
  %665 = vmatprep.subr.bf16.mxu0 0
  %666 = vmatpush1.bf16.msra.mxu0 0
  %667 = vmatprep.subr.bf16.mxu0 0
  %668 = vmatpush1.bf16.msra.mxu0 0
  %669 = vmatprep.subr.bf16.mxu0 0
  %670 = vmatpush1.bf16.msra.mxu0 0
  %671 = vmatprep.subr.bf16.mxu0 0
  %672 = vmatpush1.bf16.msra.mxu0 0
  %673 = vmatprep.subr.bf16.mxu0 0
  %674 = vmatpush1.bf16.msra.mxu0 0
  %675 = vmatprep.mubr.bf16.mxu0 0
  %676 = vmatmul.mubr.bf16.gmra.mrb[0].mxu0 %v641
  %v677 = vpop.f32.mrb[0].mxu0
  %v678 = vadd.f32 0.0, %v677
  %v679 = vpop.f32.mrb[0].mxu0
  %v680 = vpop.f32.mrb[0].mxu0
  %v681 = vadd.f32 0.0, %v680
  %v682 = vpop.f32.mrb[0].mxu0
  %683 = vdwg.mxu0
  %v684 = vpack.c.bf16 %v681, %v678
  %v686 = vsel %vm121, %v684, 0
  %v689 = vsel %vm544, %v44, 0
  %691 = vmatprep.subr.bf16.mxu0 0
  %692 = vmatpush1.bf16.msra.mxu0 %v689
  %693 = vmatprep.subr.bf16.mxu0 0
  %694 = vmatpush1.bf16.msra.mxu0 0
  %695 = vmatprep.subr.bf16.mxu0 0
  %696 = vmatpush1.bf16.msra.mxu0 0
  %697 = vmatprep.subr.bf16.mxu0 0
  %698 = vmatpush1.bf16.msra.mxu0 0
  %699 = vmatprep.subr.bf16.mxu0 0
  %700 = vmatpush1.bf16.msra.mxu0 0
  %701 = vmatprep.subr.bf16.mxu0 0
  %702 = vmatpush1.bf16.msra.mxu0 0
  %703 = vmatprep.subr.bf16.mxu0 0
  %704 = vmatpush1.bf16.msra.mxu0 0
  %705 = vmatprep.subr.bf16.mxu0 0
  %706 = vmatpush1.bf16.msra.mxu0 0
  %707 = vmatprep.subr.bf16.mxu0 0
  %708 = vmatpush1.bf16.msra.mxu0 0
  %709 = vmatprep.subr.bf16.mxu0 0
  %710 = vmatpush1.bf16.msra.mxu0 0
  %711 = vmatprep.subr.bf16.mxu0 0
  %712 = vmatpush1.bf16.msra.mxu0 0
  %713 = vmatprep.subr.bf16.mxu0 0
  %714 = vmatpush1.bf16.msra.mxu0 0
  %715 = vmatprep.subr.bf16.mxu0 0
  %716 = vmatpush1.bf16.msra.mxu0 0
  %717 = vmatprep.subr.bf16.mxu0 0
  %718 = vmatpush1.bf16.msra.mxu0 0
  %719 = vmatprep.subr.bf16.mxu0 0
  %720 = vmatpush1.bf16.msra.mxu0 0
  %721 = vmatprep.subr.bf16.mxu0 0
  %722 = vmatpush1.bf16.msra.mxu0 0
  %723 = vmatprep.mubr.bf16.mxu0 0
  %724 = vmatmul.mubr.bf16.gmra.mrb[0].mxu0 %v686
  %v725 = vpop.f32.mrb[0].mxu0
  %v726 = vadd.f32 0.0, %v725
  %v727 = vpop.f32.mrb[0].mxu0
  %v728 = vpop.f32.mrb[0].mxu0
  %v729 = vadd.f32 0.0, %v728
  %v730 = vpop.f32.mrb[0].mxu0
  %731 = vdwg.mxu0
  %v732 = vadd.f32 %v630, %v726
  %v733 = vadd.f32 %v633, %v729
  %v734 = vpack.c.bf16 %v442, %v441
  %735 = vrot.lane.b32.xlu0 %v117, 40
  %v736 = vpop.permute.xlu0 %735
  %v739 = vsel %vm173, %v734, 0
  %741 = vmatprep.subr.bf16.mxu0 0
  %742 = vmatpush1.bf16.msra.mxu0 %v736
  %743 = vmatprep.subr.bf16.mxu0 0
  %744 = vmatpush1.bf16.msra.mxu0 0
  %745 = vmatprep.subr.bf16.mxu0 0
  %746 = vmatpush1.bf16.msra.mxu0 0
  %747 = vmatprep.subr.bf16.mxu0 0
  %748 = vmatpush1.bf16.msra.mxu0 0
  %749 = vmatprep.subr.bf16.mxu0 0
  %750 = vmatpush1.bf16.msra.mxu0 0
  %751 = vmatprep.subr.bf16.mxu0 0
  %752 = vmatpush1.bf16.msra.mxu0 0
  %753 = vmatprep.subr.bf16.mxu0 0
  %754 = vmatpush1.bf16.msra.mxu0 0
  %755 = vmatprep.subr.bf16.mxu0 0
  %756 = vmatpush1.bf16.msra.mxu0 0
  %757 = vmatprep.subr.bf16.mxu0 0
  %758 = vmatpush1.bf16.msra.mxu0 0
  %759 = vmatprep.subr.bf16.mxu0 0
  %760 = vmatpush1.bf16.msra.mxu0 0
  %761 = vmatprep.subr.bf16.mxu0 0
  %762 = vmatpush1.bf16.msra.mxu0 0
  %763 = vmatprep.subr.bf16.mxu0 0
  %764 = vmatpush1.bf16.msra.mxu0 0
  %765 = vmatprep.subr.bf16.mxu0 0
  %766 = vmatpush1.bf16.msra.mxu0 0
  %767 = vmatprep.subr.bf16.mxu0 0
  %768 = vmatpush1.bf16.msra.mxu0 0
  %769 = vmatprep.subr.bf16.mxu0 0
  %770 = vmatpush1.bf16.msra.mxu0 0
  %771 = vmatprep.subr.bf16.mxu0 0
  %772 = vmatpush1.bf16.msra.mxu0 0
  %773 = vmatprep.mubr.bf16.mxu0 0
  %774 = vmatmul.mubr.bf16.gmra.mrb[0].mxu0 %v739
  %v775 = vpop.f32.mrb[0].mxu0
  %v776 = vadd.f32 0.0, %v775
  %v777 = vpop.f32.mrb[0].mxu0
  %v778 = vpop.f32.mrb[0].mxu0
  %v779 = vadd.f32 0.0, %v778
  %v780 = vpop.f32.mrb[0].mxu0
  %781 = vdwg.mxu0
  %v782 = vpack.c.bf16 %v779, %v776
  %v784 = vsel %vm121, %v782, 0
  %v787 = vsel %vm544, %v45, 0
  %789 = vmatprep.subr.bf16.mxu0 0
  %790 = vmatpush1.bf16.msra.mxu0 %v787
  %791 = vmatprep.subr.bf16.mxu0 0
  %792 = vmatpush1.bf16.msra.mxu0 0
  %793 = vmatprep.subr.bf16.mxu0 0
  %794 = vmatpush1.bf16.msra.mxu0 0
  %795 = vmatprep.subr.bf16.mxu0 0
  %796 = vmatpush1.bf16.msra.mxu0 0
  %797 = vmatprep.subr.bf16.mxu0 0
  %798 = vmatpush1.bf16.msra.mxu0 0
  %799 = vmatprep.subr.bf16.mxu0 0
  %800 = vmatpush1.bf16.msra.mxu0 0
  %801 = vmatprep.subr.bf16.mxu0 0
  %802 = vmatpush1.bf16.msra.mxu0 0
  %803 = vmatprep.subr.bf16.mxu0 0
  %804 = vmatpush1.bf16.msra.mxu0 0
  %805 = vmatprep.subr.bf16.mxu0 0
  %806 = vmatpush1.bf16.msra.mxu0 0
  %807 = vmatprep.subr.bf16.mxu0 0
  %808 = vmatpush1.bf16.msra.mxu0 0
  %809 = vmatprep.subr.bf16.mxu0 0
  %810 = vmatpush1.bf16.msra.mxu0 0
  %811 = vmatprep.subr.bf16.mxu0 0
  %812 = vmatpush1.bf16.msra.mxu0 0
  %813 = vmatprep.subr.bf16.mxu0 0
  %814 = vmatpush1.bf16.msra.mxu0 0
  %815 = vmatprep.subr.bf16.mxu0 0
  %816 = vmatpush1.bf16.msra.mxu0 0
  %817 = vmatprep.subr.bf16.mxu0 0
  %818 = vmatpush1.bf16.msra.mxu0 0
  %819 = vmatprep.subr.bf16.mxu0 0
  %820 = vmatpush1.bf16.msra.mxu0 0
  %821 = vmatprep.mubr.bf16.mxu0 0
  %822 = vmatmul.mubr.bf16.gmra.mrb[0].mxu0 %v784
  %v823 = vpop.f32.mrb[0].mxu0
  %v824 = vadd.f32 0.0, %v823
  %v825 = vpop.f32.mrb[0].mxu0
  %v826 = vpop.f32.mrb[0].mxu0
  %v827 = vadd.f32 0.0, %v826
  %v828 = vpop.f32.mrb[0].mxu0
  %829 = vdwg.mxu0
  %v830 = vadd.f32 %v732, %v824
  %v831 = vadd.f32 %v733, %v827
  %v832 = vadd.f32 %v33, %v830
  %v833 = vadd.f32 %v34, %v831
  %v834 = vsel %vm72, %v832, 0.0
  %835 = vadd.xlane.f32.xlu0 %v834
  %v836 = vpop.xlane.xlu0 %835
  %v837 = vsel %vm72, %v833, 0.0
  %838 = vadd.xlane.f32.xlu0 %v837
  %v839 = vpop.xlane.xlu0 %838
  %v840 = vrcp.pop 32.0
  %v841 = vmul.f32 %v836, %v840
  %v842 = vmul.f32 %v839, %v840
  %v843 = vsub.f32 %v832, %v841
  %v844 = vsub.f32 %v833, %v842
  %v845 = vmul.f32 %v843, %v843
  %v846 = vmul.f32 %v844, %v844
  %v847 = vsel %vm72, %v845, 0.0
  %848 = vadd.xlane.f32.xlu0 %v847
  %v849 = vpop.xlane.xlu0 %848
  %v850 = vsel %vm72, %v846, 0.0
  %851 = vadd.xlane.f32.xlu0 %v850
  %v852 = vpop.xlane.xlu0 %851
  %v853 = vmul.f32 %v849, %v840
  %v854 = vmul.f32 %v852, %v840
  %v855 = vadd.f32 %v853, 1e-12
  %v856 = vadd.f32 %v854, 1e-12
  %v857 = vrsqrt.pop %v855
  %v858 = vrsqrt.pop %v856
  %v859 = vmul.f32 %v843, %v857
  %v860 = vmul.f32 %v844, %v858
  %v861 = vlaneseq
  %v862 = vshrl.u32 %v861, 7
  %v863 = vsub.s32 0, %v862
  %v864 = vrot.slane %v58, %v863
  %v865 = vmul.f32 %v859, %v864
  %v866 = vmul.f32 %v860, %v864
  %v867 = vlaneseq
  %v868 = vshrl.u32 %v867, 7
  %v869 = vsub.s32 1, %v868
  %v870 = vrot.slane %v58, %v869
  %v871 = vadd.f32 %v865, %v870
  %v872 = vadd.f32 %v866, %v870
  %v873 = vpack.c.bf16 %v872, %v871
  %v874 = vlaneseq
  %v875 = vshrl.u32 %v874, 7
  %v876 = vsub.s32 2, %v875
  %v877 = vrot.slane %v58, %v876
  %v882 = vunpack.c.l.b16 %v46
  %v883 = vunpack.c.l.b16 %v47
  %v884 = vunpack.c.l.b16 %v48
  %v885 = vunpack.c.l.b16 %v49
  %v886 = vpack.c.b16 %v883, %v882
  %v887 = vpack.c.b16 %v885, %v884
  %v891 = vsel %vm72, %v873, 0
  %893 = vmatprep.subr.bf16.mxu0 0
  %894 = vmatpush1.bf16.msra.mxu0 %v886
  %895 = vmatprep.subr.bf16.mxu0 0
  %896 = vmatpush1.bf16.msra.mxu0 %v887
  %897 = vmatprep.subr.bf16.mxu0 0
  %898 = vmatpush1.bf16.msra.mxu0 0
  %899 = vmatprep.subr.bf16.mxu0 0
  %900 = vmatpush1.bf16.msra.mxu0 0
  %901 = vmatprep.subr.bf16.mxu0 0
  %902 = vmatpush1.bf16.msra.mxu0 0
  %903 = vmatprep.subr.bf16.mxu0 0
  %904 = vmatpush1.bf16.msra.mxu0 0
  %905 = vmatprep.subr.bf16.mxu0 0
  %906 = vmatpush1.bf16.msra.mxu0 0
  %907 = vmatprep.subr.bf16.mxu0 0
  %908 = vmatpush1.bf16.msra.mxu0 0
  %909 = vmatprep.subr.bf16.mxu0 0
  %910 = vmatpush1.bf16.msra.mxu0 0
  %911 = vmatprep.subr.bf16.mxu0 0
  %912 = vmatpush1.bf16.msra.mxu0 0
  %913 = vmatprep.subr.bf16.mxu0 0
  %914 = vmatpush1.bf16.msra.mxu0 0
  %915 = vmatprep.subr.bf16.mxu0 0
  %916 = vmatpush1.bf16.msra.mxu0 0
  %917 = vmatprep.subr.bf16.mxu0 0
  %918 = vmatpush1.bf16.msra.mxu0 0
  %919 = vmatprep.subr.bf16.mxu0 0
  %920 = vmatpush1.bf16.msra.mxu0 0
  %921 = vmatprep.subr.bf16.mxu0 0
  %922 = vmatpush1.bf16.msra.mxu0 0
  %923 = vmatprep.subr.bf16.mxu0 0
  %924 = vmatpush1.bf16.msra.mxu0 0
  %925 = vmatprep.mubr.bf16.mxu0 0
  %926 = vmatmul.mubr.bf16.gmra.mrb[0].mxu0 %v891
  %v927 = vpop.f32.mrb[0].mxu0
  %v928 = vadd.f32 %v877, %v927
  %v929 = vpop.f32.mrb[0].mxu0
  %v930 = vpop.f32.mrb[0].mxu0
  %v931 = vadd.f32 %v877, %v930
  %v932 = vpop.f32.mrb[0].mxu0
  %933 = vdwg.mxu0
  %v934 = vmul.f32 %v928, 0.5
  %v935 = vmul.f32 %v931, 0.5
  %v936 = vmul.f32 %v928, 0.044715
  %v937 = vmul.f32 %v931, 0.044715
  %v938 = vmul.f32 %v936, %v928
  %v939 = vmul.f32 %v937, %v931
  %v940 = vmul.f32 %v938, %v928
  %v941 = vmul.f32 %v939, %v931
  %v942 = vadd.f32 %v928, %v940
  %v943 = vadd.f32 %v931, %v941
  %v944 = vmul.f32 %v942, 0.7978846
  %v945 = vmul.f32 %v943, 0.7978846
  %v946 = vtanh.pop %v944
  %v947 = vtanh.pop %v945
  %v948 = vadd.f32 %v946, 1.0
  %v949 = vadd.f32 %v947, 1.0
  %v950 = vmul.f32 %v934, %v948
  %v951 = vmul.f32 %v935, %v949
  %v952 = vpack.c.bf16 %v951, %v950
  %v953 = vlaneseq
  %v954 = vshrl.u32 %v953, 7
  %v955 = vsub.s32 3, %v954
  %v956 = vrot.slane %v58, %v955
  %v965 = vunpack.c.l.b16 %v50
  %v966 = vunpack.c.l.b16 %v51
  %v967 = vunpack.c.l.b16 %v52
  %v968 = vunpack.c.l.b16 %v53
  %v969 = vunpack.c.l.b16 %v54
  %v970 = vunpack.c.l.b16 %v55
  %v971 = vunpack.c.l.b16 %v56
  %v972 = vunpack.c.l.b16 %v57
  %v973 = vpack.c.b16 %v966, %v965
  %v974 = vpack.c.b16 %v968, %v967
  %v975 = vpack.c.b16 %v970, %v969
  %v976 = vpack.c.b16 %v972, %v971
  %vm981 = vcmask 523264
  %v983 = vsel %vm981, %v952, 0
  %985 = vmatprep.subr.bf16.mxu0 0
  %986 = vmatpush1.bf16.msra.mxu0 %v973
  %987 = vmatprep.subr.bf16.mxu0 0
  %988 = vmatpush1.bf16.msra.mxu0 %v974
  %989 = vmatprep.subr.bf16.mxu0 0
  %990 = vmatpush1.bf16.msra.mxu0 %v975
  %991 = vmatprep.subr.bf16.mxu0 0
  %992 = vmatpush1.bf16.msra.mxu0 %v976
  %993 = vmatprep.subr.bf16.mxu0 0
  %994 = vmatpush1.bf16.msra.mxu0 0
  %995 = vmatprep.subr.bf16.mxu0 0
  %996 = vmatpush1.bf16.msra.mxu0 0
  %997 = vmatprep.subr.bf16.mxu0 0
  %998 = vmatpush1.bf16.msra.mxu0 0
  %999 = vmatprep.subr.bf16.mxu0 0
  %1000 = vmatpush1.bf16.msra.mxu0 0
  %1001 = vmatprep.subr.bf16.mxu0 0
  %1002 = vmatpush1.bf16.msra.mxu0 0
  %1003 = vmatprep.subr.bf16.mxu0 0
  %1004 = vmatpush1.bf16.msra.mxu0 0
  %1005 = vmatprep.subr.bf16.mxu0 0
  %1006 = vmatpush1.bf16.msra.mxu0 0
  %1007 = vmatprep.subr.bf16.mxu0 0
  %1008 = vmatpush1.bf16.msra.mxu0 0
  %1009 = vmatprep.subr.bf16.mxu0 0
  %1010 = vmatpush1.bf16.msra.mxu0 0
  %1011 = vmatprep.subr.bf16.mxu0 0
  %1012 = vmatpush1.bf16.msra.mxu0 0
  %1013 = vmatprep.subr.bf16.mxu0 0
  %1014 = vmatpush1.bf16.msra.mxu0 0
  %1015 = vmatprep.subr.bf16.mxu0 0
  %1016 = vmatpush1.bf16.msra.mxu0 0
  %1017 = vmatprep.mubr.bf16.mxu0 0
  %1018 = vmatmul.mubr.bf16.gmra.mrb[0].mxu0 %v983
  %v1019 = vpop.f32.mrb[0].mxu0
  %v1020 = vadd.f32 %v956, %v1019
  %v1021 = vpop.f32.mrb[0].mxu0
  %v1022 = vpop.f32.mrb[0].mxu0
  %v1023 = vadd.f32 %v956, %v1022
  %v1024 = vpop.f32.mrb[0].mxu0
  %1025 = vdwg.mxu0
  %v1026 = vadd.f32 %v871, %v1020
  %v1027 = vadd.f32 %v872, %v1023
  %v1028 = vsel %vm72, %v1026, 0.0
  %1029 = vadd.xlane.f32.xlu0 %v1028
  %v1030 = vpop.xlane.xlu0 %1029
  %v1031 = vsel %vm72, %v1027, 0.0
  %1032 = vadd.xlane.f32.xlu0 %v1031
  %v1033 = vpop.xlane.xlu0 %1032
  %v1034 = vmul.f32 %v1030, %v840
  %v1035 = vmul.f32 %v1033, %v840
  %v1036 = vsub.f32 %v1026, %v1034
  %v1037 = vsub.f32 %v1027, %v1035
  %v1038 = vmul.f32 %v1036, %v1036
  %v1039 = vmul.f32 %v1037, %v1037
  %v1040 = vsel %vm72, %v1038, 0.0
  %1041 = vadd.xlane.f32.xlu0 %v1040
  %v1042 = vpop.xlane.xlu0 %1041
  %v1043 = vsel %vm72, %v1039, 0.0
  %1044 = vadd.xlane.f32.xlu0 %v1043
  %v1045 = vpop.xlane.xlu0 %1044
  %v1046 = vmul.f32 %v1042, %v840
  %v1047 = vmul.f32 %v1045, %v840
  %v1048 = vadd.f32 %v1046, 1e-12
  %v1049 = vadd.f32 %v1047, 1e-12
  %v1050 = vrsqrt.pop %v1048
  %v1051 = vrsqrt.pop %v1049
  %v1052 = vmul.f32 %v1036, %v1050
  %v1053 = vmul.f32 %v1037, %v1051
  %v1054 = vlaneseq
  %v1055 = vshrl.u32 %v1054, 7
  %v1056 = vsub.s32 4, %v1055
  %v1057 = vrot.slane %v58, %v1056
  %v1058 = vmul.f32 %v1052, %v1057
  %v1059 = vmul.f32 %v1053, %v1057
  %v1060 = vlaneseq
  %v1061 = vshrl.u32 %v1060, 7
  %v1062 = vsub.s32 5, %v1061
  %v1063 = vrot.slane %v58, %v1062
  %v1064 = vadd.f32 %v1058, %v1063
  %v1065 = vadd.f32 %v1059, %v1063
  %s1066 = scalar_lea.vmem %s2, 16
  %v1067 = vld [vmem:[%s1066] sm:$0xf]
  %v1068 = vld [vmem:[%s1066 + $0x4] sm:$0xf]
  %v1069 = vld [vmem:[%s1066 + $0x8] sm:$0xf]
  %v1070 = vld [vmem:[%s1066 + $0xc] sm:$0xf]
  %s1071 = scalar_lea.vmem %s3, 16
  %v1072 = vld [vmem:[%s1071] sm:$0xf]
  %v1073 = vld [vmem:[%s1071 + $0x4] sm:$0xf]
  %v1074 = vld [vmem:[%s1071 + $0x8] sm:$0xf]
  %v1075 = vld [vmem:[%s1071 + $0xc] sm:$0xf]
  %s1076 = scalar_lea.vmem %s4, 16
  %v1077 = vld [vmem:[%s1076] sm:$0xf]
  %v1078 = vld [vmem:[%s1076 + $0x4] sm:$0xf]
  %v1079 = vld [vmem:[%s1076 + $0x8] sm:$0xf]
  %v1080 = vld [vmem:[%s1076 + $0xc] sm:$0xf]
  %s1081 = scalar_lea.vmem %s5, 32
  %v1082 = vld [vmem:[%s1081] sm:$0xf]
  %v1083 = vld [vmem:[%s1081 + $0x4] sm:$0xf]
  %v1084 = vld [vmem:[%s1081 + $0x8] sm:$0xf]
  %v1085 = vld [vmem:[%s1081 + $0xc] sm:$0xf]
  %v1086 = vld [vmem:[%s1081 + $0x10] sm:$0xf]
  %v1087 = vld [vmem:[%s1081 + $0x14] sm:$0xf]
  %v1088 = vld [vmem:[%s1081 + $0x18] sm:$0xf]
  %v1089 = vld [vmem:[%s1081 + $0x1c] sm:$0xf]
  %s1090 = scalar_lea.vmem %s6, 8
  %v1091 = vld [vmem:[%s1090] sm:$0xff]
  %v1092 = vpack.c.bf16 %v1065, %v1064
  %v1097 = vunpack.c.l.b16 %v1067
  %v1098 = vunpack.c.l.b16 %v1068
  %v1099 = vunpack.c.l.b16 %v1069
  %v1100 = vunpack.c.l.b16 %v1070
  %v1101 = vpack.c.b16 %v1098, %v1097
  %v1102 = vpack.c.b16 %v1100, %v1099
  %v1106 = vsel %vm72, %v1092, 0
  %1108 = vmatprep.subr.bf16.mxu0 0
  %1109 = vmatpush1.bf16.msra.mxu0 %v1101
  %1110 = vmatprep.subr.bf16.mxu0 0
  %1111 = vmatpush1.bf16.msra.mxu0 %v1102
  %1112 = vmatprep.subr.bf16.mxu0 0
  %1113 = vmatpush1.bf16.msra.mxu0 0
  %1114 = vmatprep.subr.bf16.mxu0 0
  %1115 = vmatpush1.bf16.msra.mxu0 0
  %1116 = vmatprep.subr.bf16.mxu0 0
  %1117 = vmatpush1.bf16.msra.mxu0 0
  %1118 = vmatprep.subr.bf16.mxu0 0
  %1119 = vmatpush1.bf16.msra.mxu0 0
  %1120 = vmatprep.subr.bf16.mxu0 0
  %1121 = vmatpush1.bf16.msra.mxu0 0
  %1122 = vmatprep.subr.bf16.mxu0 0
  %1123 = vmatpush1.bf16.msra.mxu0 0
  %1124 = vmatprep.subr.bf16.mxu0 0
  %1125 = vmatpush1.bf16.msra.mxu0 0
  %1126 = vmatprep.subr.bf16.mxu0 0
  %1127 = vmatpush1.bf16.msra.mxu0 0
  %1128 = vmatprep.subr.bf16.mxu0 0
  %1129 = vmatpush1.bf16.msra.mxu0 0
  %1130 = vmatprep.subr.bf16.mxu0 0
  %1131 = vmatpush1.bf16.msra.mxu0 0
  %1132 = vmatprep.subr.bf16.mxu0 0
  %1133 = vmatpush1.bf16.msra.mxu0 0
  %1134 = vmatprep.subr.bf16.mxu0 0
  %1135 = vmatpush1.bf16.msra.mxu0 0
  %1136 = vmatprep.subr.bf16.mxu0 0
  %1137 = vmatpush1.bf16.msra.mxu0 0
  %1138 = vmatprep.subr.bf16.mxu0 0
  %1139 = vmatpush1.bf16.msra.mxu0 0
  %1140 = vmatprep.mubr.bf16.mxu0 0
  %1141 = vmatmul.mubr.bf16.gmra.mrb[0].mxu0 %v1106
  %v1142 = vpop.f32.mrb[0].mxu0
  %v1143 = vadd.f32 0.0, %v1142
  %v1144 = vpop.f32.mrb[0].mxu0
  %v1145 = vpop.f32.mrb[0].mxu0
  %v1146 = vadd.f32 0.0, %v1145
  %v1147 = vpop.f32.mrb[0].mxu0
  %1148 = vdwg.mxu0
  %v1149 = vpack.c.bf16 %v1146, %v1143
  %1151 = vrot.lane.b32.xlu0 %v1149, 96
  %v1152 = vpop.permute.xlu0 %1151
  %v1154 = vsel %vm121, %v1149, 0
  %v1157 = vsel %vm121, %v1152, 0
  %1159 = vmatprep.subr.bf16.mxu0 0
  %1160 = vmatpush1.bf16.xpose.msra.mxu0 %v1157
  %1161 = vmatprep.subr.bf16.mxu0 0
  %1162 = vmatpush1.bf16.xpose.msra.mxu0 0
  %1163 = vmatprep.subr.bf16.mxu0 0
  %1164 = vmatpush1.bf16.xpose.msra.mxu0 0
  %1165 = vmatprep.subr.bf16.mxu0 0
  %1166 = vmatpush1.bf16.xpose.msra.mxu0 0
  %1167 = vmatprep.subr.bf16.mxu0 0
  %1168 = vmatpush1.bf16.xpose.msra.mxu0 0
  %1169 = vmatprep.subr.bf16.mxu0 0
  %1170 = vmatpush1.bf16.xpose.msra.mxu0 0
  %1171 = vmatprep.subr.bf16.mxu0 0
  %1172 = vmatpush1.bf16.xpose.msra.mxu0 0
  %1173 = vmatprep.subr.bf16.mxu0 0
  %1174 = vmatpush1.bf16.xpose.msra.mxu0 0
  %1175 = vmatprep.subr.bf16.mxu0 0
  %1176 = vmatpush1.bf16.xpose.msra.mxu0 0
  %1177 = vmatprep.subr.bf16.mxu0 0
  %1178 = vmatpush1.bf16.xpose.msra.mxu0 0
  %1179 = vmatprep.subr.bf16.mxu0 0
  %1180 = vmatpush1.bf16.xpose.msra.mxu0 0
  %1181 = vmatprep.subr.bf16.mxu0 0
  %1182 = vmatpush1.bf16.xpose.msra.mxu0 0
  %1183 = vmatprep.subr.bf16.mxu0 0
  %1184 = vmatpush1.bf16.xpose.msra.mxu0 0
  %1185 = vmatprep.subr.bf16.mxu0 0
  %1186 = vmatpush1.bf16.xpose.msra.mxu0 0
  %1187 = vmatprep.subr.bf16.mxu0 0
  %1188 = vmatpush1.bf16.xpose.msra.mxu0 0
  %1189 = vmatprep.subr.bf16.mxu0 0
  %1190 = vmatpush1.bf16.xpose.msra.mxu0 0
  %1191 = vmatprep.mubr.bf16.mxu0 0
  %1192 = vmatmul.mubr.bf16.gmra.mrb[0].mxu0 %v1154
  %v1193 = vpop.f32.mrb[0].mxu0
  %v1194 = vadd.f32 0.0, %v1193
  %v1195 = vpop.f32.mrb[0].mxu0
  %v1196 = vpop.f32.mrb[0].mxu0
  %v1197 = vadd.f32 0.0, %v1196
  %v1198 = vpop.f32.mrb[0].mxu0
  %1199 = vdwg.mxu0
  %v1200 = vmul.f32 %v1194, 0.35355338
  %v1201 = vmul.f32 %v1197, 0.35355338
  %v1202 = vadd.f32 %v1200, %v35
  %v1203 = vadd.f32 %v1201, %v36
  %1204 = vst.msk [vmem:[#allocation2] sm:$0xff] %vm173, %v1202
  %1205 = vst.msk [vmem:[#allocation2 + $0x8] sm:$0xff] %vm173, %v1203
  %1206 = vrot.lane.b32.xlu0 %v1149, 120
  %v1207 = vpop.permute.xlu0 %1206
  %1208 = vrot.lane.b32.xlu0 %v1149, 88
  %v1209 = vpop.permute.xlu0 %1208
  %v1211 = vsel %vm121, %v1207, 0
  %v1214 = vsel %vm121, %v1209, 0
  %1216 = vmatprep.subr.bf16.mxu0 0
  %1217 = vmatpush1.bf16.xpose.msra.mxu0 %v1214
  %1218 = vmatprep.subr.bf16.mxu0 0
  %1219 = vmatpush1.bf16.xpose.msra.mxu0 0
  %1220 = vmatprep.subr.bf16.mxu0 0
  %1221 = vmatpush1.bf16.xpose.msra.mxu0 0
  %1222 = vmatprep.subr.bf16.mxu0 0
  %1223 = vmatpush1.bf16.xpose.msra.mxu0 0
  %1224 = vmatprep.subr.bf16.mxu0 0
  %1225 = vmatpush1.bf16.xpose.msra.mxu0 0
  %1226 = vmatprep.subr.bf16.mxu0 0
  %1227 = vmatpush1.bf16.xpose.msra.mxu0 0
  %1228 = vmatprep.subr.bf16.mxu0 0
  %1229 = vmatpush1.bf16.xpose.msra.mxu0 0
  %1230 = vmatprep.subr.bf16.mxu0 0
  %1231 = vmatpush1.bf16.xpose.msra.mxu0 0
  %1232 = vmatprep.subr.bf16.mxu0 0
  %1233 = vmatpush1.bf16.xpose.msra.mxu0 0
  %1234 = vmatprep.subr.bf16.mxu0 0
  %1235 = vmatpush1.bf16.xpose.msra.mxu0 0
  %1236 = vmatprep.subr.bf16.mxu0 0
  %1237 = vmatpush1.bf16.xpose.msra.mxu0 0
  %1238 = vmatprep.subr.bf16.mxu0 0
  %1239 = vmatpush1.bf16.xpose.msra.mxu0 0
  %1240 = vmatprep.subr.bf16.mxu0 0
  %1241 = vmatpush1.bf16.xpose.msra.mxu0 0
  %1242 = vmatprep.subr.bf16.mxu0 0
  %1243 = vmatpush1.bf16.xpose.msra.mxu0 0
  %1244 = vmatprep.subr.bf16.mxu0 0
  %1245 = vmatpush1.bf16.xpose.msra.mxu0 0
  %1246 = vmatprep.subr.bf16.mxu0 0
  %1247 = vmatpush1.bf16.xpose.msra.mxu0 0
  %1248 = vmatprep.mubr.bf16.mxu0 0
  %1249 = vmatmul.mubr.bf16.gmra.mrb[0].mxu0 %v1211
  %v1250 = vpop.f32.mrb[0].mxu0
  %v1251 = vadd.f32 0.0, %v1250
  %v1252 = vpop.f32.mrb[0].mxu0
  %v1253 = vpop.f32.mrb[0].mxu0
  %v1254 = vadd.f32 0.0, %v1253
  %v1255 = vpop.f32.mrb[0].mxu0
  %1256 = vdwg.mxu0
  %v1257 = vmul.f32 %v1251, 0.35355338
  %v1258 = vmul.f32 %v1254, 0.35355338
  %v1259 = vadd.f32 %v1257, %v35
  %v1260 = vadd.f32 %v1258, %v36
  %1261 = vst.msk [vmem:[#allocation2 + $0x10] sm:$0xff] %vm173, %v1259
  %1262 = vst.msk [vmem:[#allocation2 + $0x18] sm:$0xff] %vm173, %v1260
  %1263 = vrot.lane.b32.xlu0 %v1149, 112
  %v1264 = vpop.permute.xlu0 %1263
  %1265 = vrot.lane.b32.xlu0 %v1149, 80
  %v1266 = vpop.permute.xlu0 %1265
  %v1268 = vsel %vm121, %v1264, 0
  %v1271 = vsel %vm121, %v1266, 0
  %1273 = vmatprep.subr.bf16.mxu0 0
  %1274 = vmatpush1.bf16.xpose.msra.mxu0 %v1271
  %1275 = vmatprep.subr.bf16.mxu0 0
  %1276 = vmatpush1.bf16.xpose.msra.mxu0 0
  %1277 = vmatprep.subr.bf16.mxu0 0
  %1278 = vmatpush1.bf16.xpose.msra.mxu0 0
  %1279 = vmatprep.subr.bf16.mxu0 0
  %1280 = vmatpush1.bf16.xpose.msra.mxu0 0
  %1281 = vmatprep.subr.bf16.mxu0 0
  %1282 = vmatpush1.bf16.xpose.msra.mxu0 0
  %1283 = vmatprep.subr.bf16.mxu0 0
  %1284 = vmatpush1.bf16.xpose.msra.mxu0 0
  %1285 = vmatprep.subr.bf16.mxu0 0
  %1286 = vmatpush1.bf16.xpose.msra.mxu0 0
  %1287 = vmatprep.subr.bf16.mxu0 0
  %1288 = vmatpush1.bf16.xpose.msra.mxu0 0
  %1289 = vmatprep.subr.bf16.mxu0 0
  %1290 = vmatpush1.bf16.xpose.msra.mxu0 0
  %1291 = vmatprep.subr.bf16.mxu0 0
  %1292 = vmatpush1.bf16.xpose.msra.mxu0 0
  %1293 = vmatprep.subr.bf16.mxu0 0
  %1294 = vmatpush1.bf16.xpose.msra.mxu0 0
  %1295 = vmatprep.subr.bf16.mxu0 0
  %1296 = vmatpush1.bf16.xpose.msra.mxu0 0
  %1297 = vmatprep.subr.bf16.mxu0 0
  %1298 = vmatpush1.bf16.xpose.msra.mxu0 0
  %1299 = vmatprep.subr.bf16.mxu0 0
  %1300 = vmatpush1.bf16.xpose.msra.mxu0 0
  %1301 = vmatprep.subr.bf16.mxu0 0
  %1302 = vmatpush1.bf16.xpose.msra.mxu0 0
  %1303 = vmatprep.subr.bf16.mxu0 0
  %1304 = vmatpush1.bf16.xpose.msra.mxu0 0
  %1305 = vmatprep.mubr.bf16.mxu0 0
  %1306 = vmatmul.mubr.bf16.gmra.mrb[0].mxu0 %v1268
  %v1307 = vpop.f32.mrb[0].mxu0
  %v1308 = vadd.f32 0.0, %v1307
  %v1309 = vpop.f32.mrb[0].mxu0
  %v1310 = vpop.f32.mrb[0].mxu0
  %v1311 = vadd.f32 0.0, %v1310
  %v1312 = vpop.f32.mrb[0].mxu0
  %1313 = vdwg.mxu0
  %v1314 = vmul.f32 %v1308, 0.35355338
  %v1315 = vmul.f32 %v1311, 0.35355338
  %v1316 = vadd.f32 %v1314, %v35
  %v1317 = vadd.f32 %v1315, %v36
  %1318 = vst.msk [vmem:[#allocation2 + $0x20] sm:$0xff] %vm173, %v1316
  %1319 = vst.msk [vmem:[#allocation2 + $0x28] sm:$0xff] %vm173, %v1317
  %1320 = vrot.lane.b32.xlu0 %v1149, 104
  %v1321 = vpop.permute.xlu0 %1320
  %1322 = vrot.lane.b32.xlu0 %v1149, 72
  %v1323 = vpop.permute.xlu0 %1322
  %v1325 = vsel %vm121, %v1321, 0
  %v1328 = vsel %vm121, %v1323, 0
  %1330 = vmatprep.subr.bf16.mxu0 0
  %1331 = vmatpush1.bf16.xpose.msra.mxu0 %v1328
  %1332 = vmatprep.subr.bf16.mxu0 0
  %1333 = vmatpush1.bf16.xpose.msra.mxu0 0
  %1334 = vmatprep.subr.bf16.mxu0 0
  %1335 = vmatpush1.bf16.xpose.msra.mxu0 0
  %1336 = vmatprep.subr.bf16.mxu0 0
  %1337 = vmatpush1.bf16.xpose.msra.mxu0 0
  %1338 = vmatprep.subr.bf16.mxu0 0
  %1339 = vmatpush1.bf16.xpose.msra.mxu0 0
  %1340 = vmatprep.subr.bf16.mxu0 0
  %1341 = vmatpush1.bf16.xpose.msra.mxu0 0
  %1342 = vmatprep.subr.bf16.mxu0 0
  %1343 = vmatpush1.bf16.xpose.msra.mxu0 0
  %1344 = vmatprep.subr.bf16.mxu0 0
  %1345 = vmatpush1.bf16.xpose.msra.mxu0 0
  %1346 = vmatprep.subr.bf16.mxu0 0
  %1347 = vmatpush1.bf16.xpose.msra.mxu0 0
  %1348 = vmatprep.subr.bf16.mxu0 0
  %1349 = vmatpush1.bf16.xpose.msra.mxu0 0
  %1350 = vmatprep.subr.bf16.mxu0 0
  %1351 = vmatpush1.bf16.xpose.msra.mxu0 0
  %1352 = vmatprep.subr.bf16.mxu0 0
  %1353 = vmatpush1.bf16.xpose.msra.mxu0 0
  %1354 = vmatprep.subr.bf16.mxu0 0
  %1355 = vmatpush1.bf16.xpose.msra.mxu0 0
  %1356 = vmatprep.subr.bf16.mxu0 0
  %1357 = vmatpush1.bf16.xpose.msra.mxu0 0
  %1358 = vmatprep.subr.bf16.mxu0 0
  %1359 = vmatpush1.bf16.xpose.msra.mxu0 0
  %1360 = vmatprep.subr.bf16.mxu0 0
  %1361 = vmatpush1.bf16.xpose.msra.mxu0 0
  %1362 = vmatprep.mubr.bf16.mxu0 0
  %1363 = vmatmul.mubr.bf16.gmra.mrb[0].mxu0 %v1325
  %v1364 = vpop.f32.mrb[0].mxu0
  %v1365 = vadd.f32 0.0, %v1364
  %v1366 = vpop.f32.mrb[0].mxu0
  %v1367 = vpop.f32.mrb[0].mxu0
  %v1368 = vadd.f32 0.0, %v1367
  %v1369 = vpop.f32.mrb[0].mxu0
  %1370 = vdwg.mxu0
  %v1371 = vmul.f32 %v1365, 0.35355338
  %v1372 = vmul.f32 %v1368, 0.35355338
  %v1373 = vadd.f32 %v1371, %v35
  %v1374 = vadd.f32 %v1372, %v36
  %1375 = vst.msk [vmem:[#allocation2 + $0x30] sm:$0xff] %vm173, %v1373
  %1376 = vst.msk [vmem:[#allocation2 + $0x38] sm:$0xff] %vm173, %v1374
  %v1377 = vld [vmem:[#allocation2] sm:$0xff]
  %v1378 = vld [vmem:[#allocation2 + $0x8] sm:$0xff]
  %v1379 = vld [vmem:[#allocation2 + $0x10] sm:$0xff]
  %v1380 = vld [vmem:[#allocation2 + $0x18] sm:$0xff]
  %v1381 = vld [vmem:[#allocation2 + $0x20] sm:$0xff]
  %v1382 = vld [vmem:[#allocation2 + $0x28] sm:$0xff]
  %v1383 = vld [vmem:[#allocation2 + $0x30] sm:$0xff]
  %v1384 = vld [vmem:[#allocation2 + $0x38] sm:$0xff]
  %v1385 = vsel %vm173, %v1377, -inf
  %1386 = vmax.xlane.f32.xlu0 %v1385
  %v1387 = vpop.xlane.xlu0 %1386
  %v1388 = vsel %vm173, %v1378, -inf
  %1389 = vmax.xlane.f32.xlu0 %v1388
  %v1390 = vpop.xlane.xlu0 %1389
  %v1391 = vsel %vm173, %v1379, -inf
  %1392 = vmax.xlane.f32.xlu0 %v1391
  %v1393 = vpop.xlane.xlu0 %1392
  %v1394 = vsel %vm173, %v1380, -inf
  %1395 = vmax.xlane.f32.xlu0 %v1394
  %v1396 = vpop.xlane.xlu0 %1395
  %v1397 = vsel %vm173, %v1381, -inf
  %1398 = vmax.xlane.f32.xlu0 %v1397
  %v1399 = vpop.xlane.xlu0 %1398
  %v1400 = vsel %vm173, %v1382, -inf
  %1401 = vmax.xlane.f32.xlu0 %v1400
  %v1402 = vpop.xlane.xlu0 %1401
  %v1403 = vsel %vm173, %v1383, -inf
  %1404 = vmax.xlane.f32.xlu0 %v1403
  %v1405 = vpop.xlane.xlu0 %1404
  %v1406 = vsel %vm173, %v1384, -inf
  %1407 = vmax.xlane.f32.xlu0 %v1406
  %v1408 = vpop.xlane.xlu0 %1407
  %v1409 = vsub.f32 %v1377, %v1387
  %v1410 = vsub.f32 %v1378, %v1390
  %v1411 = vsub.f32 %v1379, %v1393
  %v1412 = vsub.f32 %v1380, %v1396
  %v1413 = vsub.f32 %v1381, %v1399
  %v1414 = vsub.f32 %v1382, %v1402
  %v1415 = vsub.f32 %v1383, %v1405
  %v1416 = vsub.f32 %v1384, %v1408
  %v1417 = vmul.f32 %v1409, 1.442695
  %v1418 = vpow.pop %v1417
  %v1419 = vmul.f32 %v1410, 1.442695
  %v1420 = vpow.pop %v1419
  %v1421 = vmul.f32 %v1411, 1.442695
  %v1422 = vpow.pop %v1421
  %v1423 = vmul.f32 %v1412, 1.442695
  %v1424 = vpow.pop %v1423
  %v1425 = vmul.f32 %v1413, 1.442695
  %v1426 = vpow.pop %v1425
  %v1427 = vmul.f32 %v1414, 1.442695
  %v1428 = vpow.pop %v1427
  %v1429 = vmul.f32 %v1415, 1.442695
  %v1430 = vpow.pop %v1429
  %v1431 = vmul.f32 %v1416, 1.442695
  %v1432 = vpow.pop %v1431
  %v1433 = vsel %vm173, %v1418, 0.0
  %1434 = vadd.xlane.f32.xlu0 %v1433
  %v1435 = vpop.xlane.xlu0 %1434
  %v1436 = vsel %vm173, %v1420, 0.0
  %1437 = vadd.xlane.f32.xlu0 %v1436
  %v1438 = vpop.xlane.xlu0 %1437
  %v1439 = vsel %vm173, %v1422, 0.0
  %1440 = vadd.xlane.f32.xlu0 %v1439
  %v1441 = vpop.xlane.xlu0 %1440
  %v1442 = vsel %vm173, %v1424, 0.0
  %1443 = vadd.xlane.f32.xlu0 %v1442
  %v1444 = vpop.xlane.xlu0 %1443
  %v1445 = vsel %vm173, %v1426, 0.0
  %1446 = vadd.xlane.f32.xlu0 %v1445
  %v1447 = vpop.xlane.xlu0 %1446
  %v1448 = vsel %vm173, %v1428, 0.0
  %1449 = vadd.xlane.f32.xlu0 %v1448
  %v1450 = vpop.xlane.xlu0 %1449
  %v1451 = vsel %vm173, %v1430, 0.0
  %1452 = vadd.xlane.f32.xlu0 %v1451
  %v1453 = vpop.xlane.xlu0 %1452
  %v1454 = vsel %vm173, %v1432, 0.0
  %1455 = vadd.xlane.f32.xlu0 %v1454
  %v1456 = vpop.xlane.xlu0 %1455
  %v1457 = vrcp.pop %v1435
  %v1458 = vrcp.pop %v1438
  %v1459 = vrcp.pop %v1441
  %v1460 = vrcp.pop %v1444
  %v1461 = vrcp.pop %v1447
  %v1462 = vrcp.pop %v1450
  %v1463 = vrcp.pop %v1453
  %v1464 = vrcp.pop %v1456
  %v1465 = vmul.f32 %v1418, %v1457
  %v1466 = vmul.f32 %v1420, %v1458
  %v1467 = vmul.f32 %v1422, %v1459
  %v1468 = vmul.f32 %v1424, %v1460
  %v1469 = vmul.f32 %v1426, %v1461
  %v1470 = vmul.f32 %v1428, %v1462
  %v1471 = vmul.f32 %v1430, %v1463
  %v1472 = vmul.f32 %v1432, %v1464
  %v1473 = vpack.c.bf16 %v1466, %v1465
  %1474 = vrot.lane.b32.xlu0 %v1149, 64
  %v1475 = vpop.permute.xlu0 %1474
  %v1478 = vsel %vm173, %v1473, 0
  %1480 = vmatprep.subr.bf16.mxu0 0
  %1481 = vmatpush1.bf16.msra.mxu0 %v1475
  %1482 = vmatprep.subr.bf16.mxu0 0
  %1483 = vmatpush1.bf16.msra.mxu0 0
  %1484 = vmatprep.subr.bf16.mxu0 0
  %1485 = vmatpush1.bf16.msra.mxu0 0
  %1486 = vmatprep.subr.bf16.mxu0 0
  %1487 = vmatpush1.bf16.msra.mxu0 0
  %1488 = vmatprep.subr.bf16.mxu0 0
  %1489 = vmatpush1.bf16.msra.mxu0 0
  %1490 = vmatprep.subr.bf16.mxu0 0
  %1491 = vmatpush1.bf16.msra.mxu0 0
  %1492 = vmatprep.subr.bf16.mxu0 0
  %1493 = vmatpush1.bf16.msra.mxu0 0
  %1494 = vmatprep.subr.bf16.mxu0 0
  %1495 = vmatpush1.bf16.msra.mxu0 0
  %1496 = vmatprep.subr.bf16.mxu0 0
  %1497 = vmatpush1.bf16.msra.mxu0 0
  %1498 = vmatprep.subr.bf16.mxu0 0
  %1499 = vmatpush1.bf16.msra.mxu0 0
  %1500 = vmatprep.subr.bf16.mxu0 0
  %1501 = vmatpush1.bf16.msra.mxu0 0
  %1502 = vmatprep.subr.bf16.mxu0 0
  %1503 = vmatpush1.bf16.msra.mxu0 0
  %1504 = vmatprep.subr.bf16.mxu0 0
  %1505 = vmatpush1.bf16.msra.mxu0 0
  %1506 = vmatprep.subr.bf16.mxu0 0
  %1507 = vmatpush1.bf16.msra.mxu0 0
  %1508 = vmatprep.subr.bf16.mxu0 0
  %1509 = vmatpush1.bf16.msra.mxu0 0
  %1510 = vmatprep.subr.bf16.mxu0 0
  %1511 = vmatpush1.bf16.msra.mxu0 0
  %1512 = vmatprep.mubr.bf16.mxu0 0
  %1513 = vmatmul.mubr.bf16.gmra.mrb[0].mxu0 %v1478
  %v1514 = vpop.f32.mrb[0].mxu0
  %v1515 = vadd.f32 0.0, %v1514
  %v1516 = vpop.f32.mrb[0].mxu0
  %v1517 = vpop.f32.mrb[0].mxu0
  %v1518 = vadd.f32 0.0, %v1517
  %v1519 = vpop.f32.mrb[0].mxu0
  %1520 = vdwg.mxu0
  %v1521 = vpack.c.bf16 %v1518, %v1515
  %v1522 = vpack.c.bf16 %v1468, %v1467
  %1523 = vrot.lane.b32.xlu0 %v1149, 56
  %v1524 = vpop.permute.xlu0 %1523
  %v1527 = vsel %vm173, %v1522, 0
  %1529 = vmatprep.subr.bf16.mxu0 0
  %1530 = vmatpush1.bf16.msra.mxu0 %v1524
  %1531 = vmatprep.subr.bf16.mxu0 0
  %1532 = vmatpush1.bf16.msra.mxu0 0
  %1533 = vmatprep.subr.bf16.mxu0 0
  %1534 = vmatpush1.bf16.msra.mxu0 0
  %1535 = vmatprep.subr.bf16.mxu0 0
  %1536 = vmatpush1.bf16.msra.mxu0 0
  %1537 = vmatprep.subr.bf16.mxu0 0
  %1538 = vmatpush1.bf16.msra.mxu0 0
  %1539 = vmatprep.subr.bf16.mxu0 0
  %1540 = vmatpush1.bf16.msra.mxu0 0
  %1541 = vmatprep.subr.bf16.mxu0 0
  %1542 = vmatpush1.bf16.msra.mxu0 0
  %1543 = vmatprep.subr.bf16.mxu0 0
  %1544 = vmatpush1.bf16.msra.mxu0 0
  %1545 = vmatprep.subr.bf16.mxu0 0
  %1546 = vmatpush1.bf16.msra.mxu0 0
  %1547 = vmatprep.subr.bf16.mxu0 0
  %1548 = vmatpush1.bf16.msra.mxu0 0
  %1549 = vmatprep.subr.bf16.mxu0 0
  %1550 = vmatpush1.bf16.msra.mxu0 0
  %1551 = vmatprep.subr.bf16.mxu0 0
  %1552 = vmatpush1.bf16.msra.mxu0 0
  %1553 = vmatprep.subr.bf16.mxu0 0
  %1554 = vmatpush1.bf16.msra.mxu0 0
  %1555 = vmatprep.subr.bf16.mxu0 0
  %1556 = vmatpush1.bf16.msra.mxu0 0
  %1557 = vmatprep.subr.bf16.mxu0 0
  %1558 = vmatpush1.bf16.msra.mxu0 0
  %1559 = vmatprep.subr.bf16.mxu0 0
  %1560 = vmatpush1.bf16.msra.mxu0 0
  %1561 = vmatprep.mubr.bf16.mxu0 0
  %1562 = vmatmul.mubr.bf16.gmra.mrb[0].mxu0 %v1527
  %v1563 = vpop.f32.mrb[0].mxu0
  %v1564 = vadd.f32 0.0, %v1563
  %v1565 = vpop.f32.mrb[0].mxu0
  %v1566 = vpop.f32.mrb[0].mxu0
  %v1567 = vadd.f32 0.0, %v1566
  %v1568 = vpop.f32.mrb[0].mxu0
  %1569 = vdwg.mxu0
  %v1570 = vpack.c.bf16 %v1567, %v1564
  %v1572 = vsel %vm121, %v1570, 0
  %v1575 = vsel %vm544, %v1073, 0
  %1577 = vmatprep.subr.bf16.mxu0 0
  %1578 = vmatpush1.bf16.msra.mxu0 %v1575
  %1579 = vmatprep.subr.bf16.mxu0 0
  %1580 = vmatpush1.bf16.msra.mxu0 0
  %1581 = vmatprep.subr.bf16.mxu0 0
  %1582 = vmatpush1.bf16.msra.mxu0 0
  %1583 = vmatprep.subr.bf16.mxu0 0
  %1584 = vmatpush1.bf16.msra.mxu0 0
  %1585 = vmatprep.subr.bf16.mxu0 0
  %1586 = vmatpush1.bf16.msra.mxu0 0
  %1587 = vmatprep.subr.bf16.mxu0 0
  %1588 = vmatpush1.bf16.msra.mxu0 0
  %1589 = vmatprep.subr.bf16.mxu0 0
  %1590 = vmatpush1.bf16.msra.mxu0 0
  %1591 = vmatprep.subr.bf16.mxu0 0
  %1592 = vmatpush1.bf16.msra.mxu0 0
  %1593 = vmatprep.subr.bf16.mxu0 0
  %1594 = vmatpush1.bf16.msra.mxu0 0
  %1595 = vmatprep.subr.bf16.mxu0 0
  %1596 = vmatpush1.bf16.msra.mxu0 0
  %1597 = vmatprep.subr.bf16.mxu0 0
  %1598 = vmatpush1.bf16.msra.mxu0 0
  %1599 = vmatprep.subr.bf16.mxu0 0
  %1600 = vmatpush1.bf16.msra.mxu0 0
  %1601 = vmatprep.subr.bf16.mxu0 0
  %1602 = vmatpush1.bf16.msra.mxu0 0
  %1603 = vmatprep.subr.bf16.mxu0 0
  %1604 = vmatpush1.bf16.msra.mxu0 0
  %1605 = vmatprep.subr.bf16.mxu0 0
  %1606 = vmatpush1.bf16.msra.mxu0 0
  %1607 = vmatprep.subr.bf16.mxu0 0
  %1608 = vmatpush1.bf16.msra.mxu0 0
  %1609 = vmatprep.mubr.bf16.mxu0 0
  %1610 = vmatmul.mubr.bf16.gmra.mrb[0].mxu0 %v1572
  %v1611 = vpop.f32.mrb[0].mxu0
  %v1612 = vadd.f32 0.0, %v1611
  %v1613 = vpop.f32.mrb[0].mxu0
  %v1614 = vpop.f32.mrb[0].mxu0
  %v1615 = vadd.f32 0.0, %v1614
  %v1616 = vpop.f32.mrb[0].mxu0
  %1617 = vdwg.mxu0
  %v1619 = vsel %vm121, %v1521, 0
  %v1622 = vsel %vm544, %v1072, 0
  %1624 = vmatprep.subr.bf16.mxu0 0
  %1625 = vmatpush1.bf16.msra.mxu0 %v1622
  %1626 = vmatprep.subr.bf16.mxu0 0
  %1627 = vmatpush1.bf16.msra.mxu0 0
  %1628 = vmatprep.subr.bf16.mxu0 0
  %1629 = vmatpush1.bf16.msra.mxu0 0
  %1630 = vmatprep.subr.bf16.mxu0 0
  %1631 = vmatpush1.bf16.msra.mxu0 0
  %1632 = vmatprep.subr.bf16.mxu0 0
  %1633 = vmatpush1.bf16.msra.mxu0 0
  %1634 = vmatprep.subr.bf16.mxu0 0
  %1635 = vmatpush1.bf16.msra.mxu0 0
  %1636 = vmatprep.subr.bf16.mxu0 0
  %1637 = vmatpush1.bf16.msra.mxu0 0
  %1638 = vmatprep.subr.bf16.mxu0 0
  %1639 = vmatpush1.bf16.msra.mxu0 0
  %1640 = vmatprep.subr.bf16.mxu0 0
  %1641 = vmatpush1.bf16.msra.mxu0 0
  %1642 = vmatprep.subr.bf16.mxu0 0
  %1643 = vmatpush1.bf16.msra.mxu0 0
  %1644 = vmatprep.subr.bf16.mxu0 0
  %1645 = vmatpush1.bf16.msra.mxu0 0
  %1646 = vmatprep.subr.bf16.mxu0 0
  %1647 = vmatpush1.bf16.msra.mxu0 0
  %1648 = vmatprep.subr.bf16.mxu0 0
  %1649 = vmatpush1.bf16.msra.mxu0 0
  %1650 = vmatprep.subr.bf16.mxu0 0
  %1651 = vmatpush1.bf16.msra.mxu0 0
  %1652 = vmatprep.subr.bf16.mxu0 0
  %1653 = vmatpush1.bf16.msra.mxu0 0
  %1654 = vmatprep.subr.bf16.mxu0 0
  %1655 = vmatpush1.bf16.msra.mxu0 0
  %1656 = vmatprep.mubr.bf16.mxu0 0
  %1657 = vmatmul.mubr.bf16.gmra.mrb[0].mxu0 %v1619
  %v1658 = vpop.f32.mrb[0].mxu0
  %v1659 = vadd.f32 %v1612, %v1658
  %v1660 = vpop.f32.mrb[0].mxu0
  %v1661 = vpop.f32.mrb[0].mxu0
  %v1662 = vadd.f32 %v1615, %v1661
  %v1663 = vpop.f32.mrb[0].mxu0
  %1664 = vdwg.mxu0
  %v1665 = vpack.c.bf16 %v1470, %v1469
  %1666 = vrot.lane.b32.xlu0 %v1149, 48
  %v1667 = vpop.permute.xlu0 %1666
  %v1670 = vsel %vm173, %v1665, 0
  %1672 = vmatprep.subr.bf16.mxu0 0
  %1673 = vmatpush1.bf16.msra.mxu0 %v1667
  %1674 = vmatprep.subr.bf16.mxu0 0
  %1675 = vmatpush1.bf16.msra.mxu0 0
  %1676 = vmatprep.subr.bf16.mxu0 0
  %1677 = vmatpush1.bf16.msra.mxu0 0
  %1678 = vmatprep.subr.bf16.mxu0 0
  %1679 = vmatpush1.bf16.msra.mxu0 0
  %1680 = vmatprep.subr.bf16.mxu0 0
  %1681 = vmatpush1.bf16.msra.mxu0 0
  %1682 = vmatprep.subr.bf16.mxu0 0
  %1683 = vmatpush1.bf16.msra.mxu0 0
  %1684 = vmatprep.subr.bf16.mxu0 0
  %1685 = vmatpush1.bf16.msra.mxu0 0
  %1686 = vmatprep.subr.bf16.mxu0 0
  %1687 = vmatpush1.bf16.msra.mxu0 0
  %1688 = vmatprep.subr.bf16.mxu0 0
  %1689 = vmatpush1.bf16.msra.mxu0 0
  %1690 = vmatprep.subr.bf16.mxu0 0
  %1691 = vmatpush1.bf16.msra.mxu0 0
  %1692 = vmatprep.subr.bf16.mxu0 0
  %1693 = vmatpush1.bf16.msra.mxu0 0
  %1694 = vmatprep.subr.bf16.mxu0 0
  %1695 = vmatpush1.bf16.msra.mxu0 0
  %1696 = vmatprep.subr.bf16.mxu0 0
  %1697 = vmatpush1.bf16.msra.mxu0 0
  %1698 = vmatprep.subr.bf16.mxu0 0
  %1699 = vmatpush1.bf16.msra.mxu0 0
  %1700 = vmatprep.subr.bf16.mxu0 0
  %1701 = vmatpush1.bf16.msra.mxu0 0
  %1702 = vmatprep.subr.bf16.mxu0 0
  %1703 = vmatpush1.bf16.msra.mxu0 0
  %1704 = vmatprep.mubr.bf16.mxu0 0
  %1705 = vmatmul.mubr.bf16.gmra.mrb[0].mxu0 %v1670
  %v1706 = vpop.f32.mrb[0].mxu0
  %v1707 = vadd.f32 0.0, %v1706
  %v1708 = vpop.f32.mrb[0].mxu0
  %v1709 = vpop.f32.mrb[0].mxu0
  %v1710 = vadd.f32 0.0, %v1709
  %v1711 = vpop.f32.mrb[0].mxu0
  %1712 = vdwg.mxu0
  %v1713 = vpack.c.bf16 %v1710, %v1707
  %v1715 = vsel %vm121, %v1713, 0
  %v1718 = vsel %vm544, %v1074, 0
  %1720 = vmatprep.subr.bf16.mxu0 0
  %1721 = vmatpush1.bf16.msra.mxu0 %v1718
  %1722 = vmatprep.subr.bf16.mxu0 0
  %1723 = vmatpush1.bf16.msra.mxu0 0
  %1724 = vmatprep.subr.bf16.mxu0 0
  %1725 = vmatpush1.bf16.msra.mxu0 0
  %1726 = vmatprep.subr.bf16.mxu0 0
  %1727 = vmatpush1.bf16.msra.mxu0 0
  %1728 = vmatprep.subr.bf16.mxu0 0
  %1729 = vmatpush1.bf16.msra.mxu0 0
  %1730 = vmatprep.subr.bf16.mxu0 0
  %1731 = vmatpush1.bf16.msra.mxu0 0
  %1732 = vmatprep.subr.bf16.mxu0 0
  %1733 = vmatpush1.bf16.msra.mxu0 0
  %1734 = vmatprep.subr.bf16.mxu0 0
  %1735 = vmatpush1.bf16.msra.mxu0 0
  %1736 = vmatprep.subr.bf16.mxu0 0
  %1737 = vmatpush1.bf16.msra.mxu0 0
  %1738 = vmatprep.subr.bf16.mxu0 0
  %1739 = vmatpush1.bf16.msra.mxu0 0
  %1740 = vmatprep.subr.bf16.mxu0 0
  %1741 = vmatpush1.bf16.msra.mxu0 0
  %1742 = vmatprep.subr.bf16.mxu0 0
  %1743 = vmatpush1.bf16.msra.mxu0 0
  %1744 = vmatprep.subr.bf16.mxu0 0
  %1745 = vmatpush1.bf16.msra.mxu0 0
  %1746 = vmatprep.subr.bf16.mxu0 0
  %1747 = vmatpush1.bf16.msra.mxu0 0
  %1748 = vmatprep.subr.bf16.mxu0 0
  %1749 = vmatpush1.bf16.msra.mxu0 0
  %1750 = vmatprep.subr.bf16.mxu0 0
  %1751 = vmatpush1.bf16.msra.mxu0 0
  %1752 = vmatprep.mubr.bf16.mxu0 0
  %1753 = vmatmul.mubr.bf16.gmra.mrb[0].mxu0 %v1715
  %v1754 = vpop.f32.mrb[0].mxu0
  %v1755 = vadd.f32 0.0, %v1754
  %v1756 = vpop.f32.mrb[0].mxu0
  %v1757 = vpop.f32.mrb[0].mxu0
  %v1758 = vadd.f32 0.0, %v1757
  %v1759 = vpop.f32.mrb[0].mxu0
  %1760 = vdwg.mxu0
  %v1761 = vadd.f32 %v1659, %v1755
  %v1762 = vadd.f32 %v1662, %v1758
  %v1763 = vpack.c.bf16 %v1472, %v1471
  %1764 = vrot.lane.b32.xlu0 %v1149, 40
  %v1765 = vpop.permute.xlu0 %1764
  %v1768 = vsel %vm173, %v1763, 0
  %1770 = vmatprep.subr.bf16.mxu0 0
  %1771 = vmatpush1.bf16.msra.mxu0 %v1765
  %1772 = vmatprep.subr.bf16.mxu0 0
  %1773 = vmatpush1.bf16.msra.mxu0 0
  %1774 = vmatprep.subr.bf16.mxu0 0
  %1775 = vmatpush1.bf16.msra.mxu0 0
  %1776 = vmatprep.subr.bf16.mxu0 0
  %1777 = vmatpush1.bf16.msra.mxu0 0
  %1778 = vmatprep.subr.bf16.mxu0 0
  %1779 = vmatpush1.bf16.msra.mxu0 0
  %1780 = vmatprep.subr.bf16.mxu0 0
  %1781 = vmatpush1.bf16.msra.mxu0 0
  %1782 = vmatprep.subr.bf16.mxu0 0
  %1783 = vmatpush1.bf16.msra.mxu0 0
  %1784 = vmatprep.subr.bf16.mxu0 0
  %1785 = vmatpush1.bf16.msra.mxu0 0
  %1786 = vmatprep.subr.bf16.mxu0 0
  %1787 = vmatpush1.bf16.msra.mxu0 0
  %1788 = vmatprep.subr.bf16.mxu0 0
  %1789 = vmatpush1.bf16.msra.mxu0 0
  %1790 = vmatprep.subr.bf16.mxu0 0
  %1791 = vmatpush1.bf16.msra.mxu0 0
  %1792 = vmatprep.subr.bf16.mxu0 0
  %1793 = vmatpush1.bf16.msra.mxu0 0
  %1794 = vmatprep.subr.bf16.mxu0 0
  %1795 = vmatpush1.bf16.msra.mxu0 0
  %1796 = vmatprep.subr.bf16.mxu0 0
  %1797 = vmatpush1.bf16.msra.mxu0 0
  %1798 = vmatprep.subr.bf16.mxu0 0
  %1799 = vmatpush1.bf16.msra.mxu0 0
  %1800 = vmatprep.subr.bf16.mxu0 0
  %1801 = vmatpush1.bf16.msra.mxu0 0
  %1802 = vmatprep.mubr.bf16.mxu0 0
  %1803 = vmatmul.mubr.bf16.gmra.mrb[0].mxu0 %v1768
  %v1804 = vpop.f32.mrb[0].mxu0
  %v1805 = vadd.f32 0.0, %v1804
  %v1806 = vpop.f32.mrb[0].mxu0
  %v1807 = vpop.f32.mrb[0].mxu0
  %v1808 = vadd.f32 0.0, %v1807
  %v1809 = vpop.f32.mrb[0].mxu0
  %1810 = vdwg.mxu0
  %v1811 = vpack.c.bf16 %v1808, %v1805
  %v1813 = vsel %vm121, %v1811, 0
  %v1816 = vsel %vm544, %v1075, 0
  %1818 = vmatprep.subr.bf16.mxu0 0
  %1819 = vmatpush1.bf16.msra.mxu0 %v1816
  %1820 = vmatprep.subr.bf16.mxu0 0
  %1821 = vmatpush1.bf16.msra.mxu0 0
  %1822 = vmatprep.subr.bf16.mxu0 0
  %1823 = vmatpush1.bf16.msra.mxu0 0
  %1824 = vmatprep.subr.bf16.mxu0 0
  %1825 = vmatpush1.bf16.msra.mxu0 0
  %1826 = vmatprep.subr.bf16.mxu0 0
  %1827 = vmatpush1.bf16.msra.mxu0 0
  %1828 = vmatprep.subr.bf16.mxu0 0
  %1829 = vmatpush1.bf16.msra.mxu0 0
  %1830 = vmatprep.subr.bf16.mxu0 0
  %1831 = vmatpush1.bf16.msra.mxu0 0
  %1832 = vmatprep.subr.bf16.mxu0 0
  %1833 = vmatpush1.bf16.msra.mxu0 0
  %1834 = vmatprep.subr.bf16.mxu0 0
  %1835 = vmatpush1.bf16.msra.mxu0 0
  %1836 = vmatprep.subr.bf16.mxu0 0
  %1837 = vmatpush1.bf16.msra.mxu0 0
  %1838 = vmatprep.subr.bf16.mxu0 0
  %1839 = vmatpush1.bf16.msra.mxu0 0
  %1840 = vmatprep.subr.bf16.mxu0 0
  %1841 = vmatpush1.bf16.msra.mxu0 0
  %1842 = vmatprep.subr.bf16.mxu0 0
  %1843 = vmatpush1.bf16.msra.mxu0 0
  %1844 = vmatprep.subr.bf16.mxu0 0
  %1845 = vmatpush1.bf16.msra.mxu0 0
  %1846 = vmatprep.subr.bf16.mxu0 0
  %1847 = vmatpush1.bf16.msra.mxu0 0
  %1848 = vmatprep.subr.bf16.mxu0 0
  %1849 = vmatpush1.bf16.msra.mxu0 0
  %1850 = vmatprep.mubr.bf16.mxu0 0
  %1851 = vmatmul.mubr.bf16.gmra.mrb[0].mxu0 %v1813
  %v1852 = vpop.f32.mrb[0].mxu0
  %v1853 = vadd.f32 0.0, %v1852
  %v1854 = vpop.f32.mrb[0].mxu0
  %v1855 = vpop.f32.mrb[0].mxu0
  %v1856 = vadd.f32 0.0, %v1855
  %v1857 = vpop.f32.mrb[0].mxu0
  %1858 = vdwg.mxu0
  %v1859 = vadd.f32 %v1761, %v1853
  %v1860 = vadd.f32 %v1762, %v1856
  %v1861 = vadd.f32 %v1064, %v1859
  %v1862 = vadd.f32 %v1065, %v1860
  %v1863 = vsel %vm72, %v1861, 0.0
  %1864 = vadd.xlane.f32.xlu0 %v1863
  %v1865 = vpop.xlane.xlu0 %1864
  %v1866 = vsel %vm72, %v1862, 0.0
  %1867 = vadd.xlane.f32.xlu0 %v1866
  %v1868 = vpop.xlane.xlu0 %1867
  %v1869 = vmul.f32 %v1865, %v840
  %v1870 = vmul.f32 %v1868, %v840
  %v1871 = vsub.f32 %v1861, %v1869
  %v1872 = vsub.f32 %v1862, %v1870
  %v1873 = vmul.f32 %v1871, %v1871
  %v1874 = vmul.f32 %v1872, %v1872
  %v1875 = vsel %vm72, %v1873, 0.0
  %1876 = vadd.xlane.f32.xlu0 %v1875
  %v1877 = vpop.xlane.xlu0 %1876
  %v1878 = vsel %vm72, %v1874, 0.0
  %1879 = vadd.xlane.f32.xlu0 %v1878
  %v1880 = vpop.xlane.xlu0 %1879
  %v1881 = vmul.f32 %v1877, %v840
  %v1882 = vmul.f32 %v1880, %v840
  %v1883 = vadd.f32 %v1881, 1e-12
  %v1884 = vadd.f32 %v1882, 1e-12
  %v1885 = vrsqrt.pop %v1883
  %v1886 = vrsqrt.pop %v1884
  %v1887 = vmul.f32 %v1871, %v1885
  %v1888 = vmul.f32 %v1872, %v1886
  %v1889 = vlaneseq
  %v1890 = vshrl.u32 %v1889, 7
  %v1891 = vsub.s32 0, %v1890
  %v1892 = vrot.slane %v1091, %v1891
  %v1893 = vmul.f32 %v1887, %v1892
  %v1894 = vmul.f32 %v1888, %v1892
  %v1895 = vlaneseq
  %v1896 = vshrl.u32 %v1895, 7
  %v1897 = vsub.s32 1, %v1896
  %v1898 = vrot.slane %v1091, %v1897
  %v1899 = vadd.f32 %v1893, %v1898
  %v1900 = vadd.f32 %v1894, %v1898
  %v1901 = vpack.c.bf16 %v1900, %v1899
  %v1902 = vlaneseq
  %v1903 = vshrl.u32 %v1902, 7
  %v1904 = vsub.s32 2, %v1903
  %v1905 = vrot.slane %v1091, %v1904
  %v1910 = vunpack.c.l.b16 %v1077
  %v1911 = vunpack.c.l.b16 %v1078
  %v1912 = vunpack.c.l.b16 %v1079
  %v1913 = vunpack.c.l.b16 %v1080
  %v1914 = vpack.c.b16 %v1911, %v1910
  %v1915 = vpack.c.b16 %v1913, %v1912
  %v1919 = vsel %vm72, %v1901, 0
  %1921 = vmatprep.subr.bf16.mxu0 0
  %1922 = vmatpush1.bf16.msra.mxu0 %v1914
  %1923 = vmatprep.subr.bf16.mxu0 0
  %1924 = vmatpush1.bf16.msra.mxu0 %v1915
  %1925 = vmatprep.subr.bf16.mxu0 0
  %1926 = vmatpush1.bf16.msra.mxu0 0
  %1927 = vmatprep.subr.bf16.mxu0 0
  %1928 = vmatpush1.bf16.msra.mxu0 0
  %1929 = vmatprep.subr.bf16.mxu0 0
  %1930 = vmatpush1.bf16.msra.mxu0 0
  %1931 = vmatprep.subr.bf16.mxu0 0
  %1932 = vmatpush1.bf16.msra.mxu0 0
  %1933 = vmatprep.subr.bf16.mxu0 0
  %1934 = vmatpush1.bf16.msra.mxu0 0
  %1935 = vmatprep.subr.bf16.mxu0 0
  %1936 = vmatpush1.bf16.msra.mxu0 0
  %1937 = vmatprep.subr.bf16.mxu0 0
  %1938 = vmatpush1.bf16.msra.mxu0 0
  %1939 = vmatprep.subr.bf16.mxu0 0
  %1940 = vmatpush1.bf16.msra.mxu0 0
  %1941 = vmatprep.subr.bf16.mxu0 0
  %1942 = vmatpush1.bf16.msra.mxu0 0
  %1943 = vmatprep.subr.bf16.mxu0 0
  %1944 = vmatpush1.bf16.msra.mxu0 0
  %1945 = vmatprep.subr.bf16.mxu0 0
  %1946 = vmatpush1.bf16.msra.mxu0 0
  %1947 = vmatprep.subr.bf16.mxu0 0
  %1948 = vmatpush1.bf16.msra.mxu0 0
  %1949 = vmatprep.subr.bf16.mxu0 0
  %1950 = vmatpush1.bf16.msra.mxu0 0
  %1951 = vmatprep.subr.bf16.mxu0 0
  %1952 = vmatpush1.bf16.msra.mxu0 0
  %1953 = vmatprep.mubr.bf16.mxu0 0
  %1954 = vmatmul.mubr.bf16.gmra.mrb[0].mxu0 %v1919
  %v1955 = vpop.f32.mrb[0].mxu0
  %v1956 = vadd.f32 %v1905, %v1955
  %v1957 = vpop.f32.mrb[0].mxu0
  %v1958 = vpop.f32.mrb[0].mxu0
  %v1959 = vadd.f32 %v1905, %v1958
  %v1960 = vpop.f32.mrb[0].mxu0
  %1961 = vdwg.mxu0
  %v1962 = vmul.f32 %v1956, 0.5
  %v1963 = vmul.f32 %v1959, 0.5
  %v1964 = vmul.f32 %v1956, 0.044715
  %v1965 = vmul.f32 %v1959, 0.044715
  %v1966 = vmul.f32 %v1964, %v1956
  %v1967 = vmul.f32 %v1965, %v1959
  %v1968 = vmul.f32 %v1966, %v1956
  %v1969 = vmul.f32 %v1967, %v1959
  %v1970 = vadd.f32 %v1956, %v1968
  %v1971 = vadd.f32 %v1959, %v1969
  %v1972 = vmul.f32 %v1970, 0.7978846
  %v1973 = vmul.f32 %v1971, 0.7978846
  %v1974 = vtanh.pop %v1972
  %v1975 = vtanh.pop %v1973
  %v1976 = vadd.f32 %v1974, 1.0
  %v1977 = vadd.f32 %v1975, 1.0
  %v1978 = vmul.f32 %v1962, %v1976
  %v1979 = vmul.f32 %v1963, %v1977
  %v1980 = vpack.c.bf16 %v1979, %v1978
  %v1981 = vlaneseq
  %v1982 = vshrl.u32 %v1981, 7
  %v1983 = vsub.s32 3, %v1982
  %v1984 = vrot.slane %v1091, %v1983
  %v1993 = vunpack.c.l.b16 %v1082
  %v1994 = vunpack.c.l.b16 %v1083
  %v1995 = vunpack.c.l.b16 %v1084
  %v1996 = vunpack.c.l.b16 %v1085
  %v1997 = vunpack.c.l.b16 %v1086
  %v1998 = vunpack.c.l.b16 %v1087
  %v1999 = vunpack.c.l.b16 %v1088
  %v2000 = vunpack.c.l.b16 %v1089
  %v2001 = vpack.c.b16 %v1994, %v1993
  %v2002 = vpack.c.b16 %v1996, %v1995
  %v2003 = vpack.c.b16 %v1998, %v1997
  %v2004 = vpack.c.b16 %v2000, %v1999
  %v2010 = vsel %vm981, %v1980, 0
  %2012 = vmatprep.subr.bf16.mxu0 0
  %2013 = vmatpush1.bf16.msra.mxu0 %v2001
  %2014 = vmatprep.subr.bf16.mxu0 0
  %2015 = vmatpush1.bf16.msra.mxu0 %v2002
  %2016 = vmatprep.subr.bf16.mxu0 0
  %2017 = vmatpush1.bf16.msra.mxu0 %v2003
  %2018 = vmatprep.subr.bf16.mxu0 0
  %2019 = vmatpush1.bf16.msra.mxu0 %v2004
  %2020 = vmatprep.subr.bf16.mxu0 0
  %2021 = vmatpush1.bf16.msra.mxu0 0
  %2022 = vmatprep.subr.bf16.mxu0 0
  %2023 = vmatpush1.bf16.msra.mxu0 0
  %2024 = vmatprep.subr.bf16.mxu0 0
  %2025 = vmatpush1.bf16.msra.mxu0 0
  %2026 = vmatprep.subr.bf16.mxu0 0
  %2027 = vmatpush1.bf16.msra.mxu0 0
  %2028 = vmatprep.subr.bf16.mxu0 0
  %2029 = vmatpush1.bf16.msra.mxu0 0
  %2030 = vmatprep.subr.bf16.mxu0 0
  %2031 = vmatpush1.bf16.msra.mxu0 0
  %2032 = vmatprep.subr.bf16.mxu0 0
  %2033 = vmatpush1.bf16.msra.mxu0 0
  %2034 = vmatprep.subr.bf16.mxu0 0
  %2035 = vmatpush1.bf16.msra.mxu0 0
  %2036 = vmatprep.subr.bf16.mxu0 0
  %2037 = vmatpush1.bf16.msra.mxu0 0
  %2038 = vmatprep.subr.bf16.mxu0 0
  %2039 = vmatpush1.bf16.msra.mxu0 0
  %2040 = vmatprep.subr.bf16.mxu0 0
  %2041 = vmatpush1.bf16.msra.mxu0 0
  %2042 = vmatprep.subr.bf16.mxu0 0
  %2043 = vmatpush1.bf16.msra.mxu0 0
  %2044 = vmatprep.mubr.bf16.mxu0 0
  %2045 = vmatmul.mubr.bf16.gmra.mrb[0].mxu0 %v2010
  %v2046 = vpop.f32.mrb[0].mxu0
  %v2047 = vadd.f32 %v1984, %v2046
  %v2048 = vpop.f32.mrb[0].mxu0
  %v2049 = vpop.f32.mrb[0].mxu0
  %v2050 = vadd.f32 %v1984, %v2049
  %v2051 = vpop.f32.mrb[0].mxu0
  %2052 = vdwg.mxu0
  %v2053 = vadd.f32 %v1899, %v2047
  %v2054 = vadd.f32 %v1900, %v2050
  %v2055 = vsel %vm72, %v2053, 0.0
  %2056 = vadd.xlane.f32.xlu0 %v2055
  %v2057 = vpop.xlane.xlu0 %2056
  %v2058 = vsel %vm72, %v2054, 0.0
  %2059 = vadd.xlane.f32.xlu0 %v2058
  %v2060 = vpop.xlane.xlu0 %2059
  %v2061 = vmul.f32 %v2057, %v840
  %v2062 = vmul.f32 %v2060, %v840
  %v2063 = vsub.f32 %v2053, %v2061
  %v2064 = vsub.f32 %v2054, %v2062
  %v2065 = vmul.f32 %v2063, %v2063
  %v2066 = vmul.f32 %v2064, %v2064
  %v2067 = vsel %vm72, %v2065, 0.0
  %2068 = vadd.xlane.f32.xlu0 %v2067
  %v2069 = vpop.xlane.xlu0 %2068
  %v2070 = vsel %vm72, %v2066, 0.0
  %2071 = vadd.xlane.f32.xlu0 %v2070
  %v2072 = vpop.xlane.xlu0 %2071
  %v2073 = vmul.f32 %v2069, %v840
  %v2074 = vmul.f32 %v2072, %v840
  %v2075 = vadd.f32 %v2073, 1e-12
  %v2076 = vadd.f32 %v2074, 1e-12
  %v2077 = vrsqrt.pop %v2075
  %v2078 = vrsqrt.pop %v2076
  %v2079 = vmul.f32 %v2063, %v2077
  %v2080 = vmul.f32 %v2064, %v2078
  %v2081 = vlaneseq
  %v2082 = vshrl.u32 %v2081, 7
  %v2083 = vsub.s32 4, %v2082
  %v2084 = vrot.slane %v1091, %v2083
  %v2085 = vmul.f32 %v2079, %v2084
  %v2086 = vmul.f32 %v2080, %v2084
  %v2087 = vlaneseq
  %v2088 = vshrl.u32 %v2087, 7
  %v2089 = vsub.s32 5, %v2088
  %v2090 = vrot.slane %v1091, %v2089
  %v2091 = vadd.f32 %v2085, %v2090
  %v2092 = vadd.f32 %v2086, %v2090
  %v2093 = vld [vmem:[%s7] sm:$0xf]
  %v2094 = vld [vmem:[%s7 + $0x4] sm:$0xf]
  %v2095 = vld [vmem:[%s7 + $0x8] sm:$0xf]
  %v2096 = vld [vmem:[%s7 + $0xc] sm:$0xf]
  %v2097 = vpack.c.bf16 %v2092, %v2091
  %v2098 = vlaneseq
  %v2099 = vshrl.u32 %v2098, 7
  %v2100 = vsub.s32 0, %v2099
  %v2101 = vrot.slane %v37, %v2100
  %v2106 = vunpack.c.l.b16 %v2093
  %v2107 = vunpack.c.l.b16 %v2094
  %v2108 = vunpack.c.l.b16 %v2095
  %v2109 = vunpack.c.l.b16 %v2096
  %v2110 = vpack.c.b16 %v2107, %v2106
  %v2111 = vpack.c.b16 %v2109, %v2108
  %v2115 = vsel %vm72, %v2097, 0
  %2117 = vmatprep.subr.bf16.mxu0 0
  %2118 = vmatpush1.bf16.msra.mxu0 %v2110
  %2119 = vmatprep.subr.bf16.mxu0 0
  %2120 = vmatpush1.bf16.msra.mxu0 %v2111
  %2121 = vmatprep.subr.bf16.mxu0 0
  %2122 = vmatpush1.bf16.msra.mxu0 0
  %2123 = vmatprep.subr.bf16.mxu0 0
  %2124 = vmatpush1.bf16.msra.mxu0 0
  %2125 = vmatprep.subr.bf16.mxu0 0
  %2126 = vmatpush1.bf16.msra.mxu0 0
  %2127 = vmatprep.subr.bf16.mxu0 0
  %2128 = vmatpush1.bf16.msra.mxu0 0
  %2129 = vmatprep.subr.bf16.mxu0 0
  %2130 = vmatpush1.bf16.msra.mxu0 0
  %2131 = vmatprep.subr.bf16.mxu0 0
  %2132 = vmatpush1.bf16.msra.mxu0 0
  %2133 = vmatprep.subr.bf16.mxu0 0
  %2134 = vmatpush1.bf16.msra.mxu0 0
  %2135 = vmatprep.subr.bf16.mxu0 0
  %2136 = vmatpush1.bf16.msra.mxu0 0
  %2137 = vmatprep.subr.bf16.mxu0 0
  %2138 = vmatpush1.bf16.msra.mxu0 0
  %2139 = vmatprep.subr.bf16.mxu0 0
  %2140 = vmatpush1.bf16.msra.mxu0 0
  %2141 = vmatprep.subr.bf16.mxu0 0
  %2142 = vmatpush1.bf16.msra.mxu0 0
  %2143 = vmatprep.subr.bf16.mxu0 0
  %2144 = vmatpush1.bf16.msra.mxu0 0
  %2145 = vmatprep.subr.bf16.mxu0 0
  %2146 = vmatpush1.bf16.msra.mxu0 0
  %2147 = vmatprep.subr.bf16.mxu0 0
  %2148 = vmatpush1.bf16.msra.mxu0 0
  %2149 = vmatprep.mubr.bf16.mxu0 0
  %2150 = vmatmul.mubr.bf16.gmra.mrb[0].mxu0 %v2115
  %v2151 = vpop.f32.mrb[0].mxu0
  %v2152 = vadd.f32 %v2101, %v2151
  %v2153 = vpop.f32.mrb[0].mxu0
  %v2154 = vpop.f32.mrb[0].mxu0
  %v2155 = vadd.f32 %v2101, %v2154
  %v2156 = vpop.f32.mrb[0].mxu0
  %2157 = vdwg.mxu0
  %v2158 = vtanh.pop %v2152
  %v2159 = vtanh.pop %v2155
  %v2160 = vld [vmem:[%s8] sm:$0xf]
  %v2161 = vld [vmem:[%s8 + $0x4] sm:$0xf]
  %v2162 = vpack.c.bf16 %v2159, %v2158
  %v2163 = vlaneseq
  %v2164 = vshrl.u32 %v2163, 7
  %v2165 = vsub.s32 1, %v2164
  %v2166 = vrot.slane %v37, %v2165
  %v2169 = vunpack.c.l.b16 %v2160
  %v2170 = vunpack.c.l.b16 %v2161
  %v2171 = vpack.c.b16 %v2170, %v2169
  %v2174 = vsel %vm173, %v2162, 0
  %2176 = vmatprep.subr.bf16.mxu0 0
  %2177 = vmatpush1.bf16.msra.mxu0 %v2171
  %2178 = vmatprep.subr.bf16.mxu0 0
  %2179 = vmatpush1.bf16.msra.mxu0 0
  %2180 = vmatprep.subr.bf16.mxu0 0
  %2181 = vmatpush1.bf16.msra.mxu0 0
  %2182 = vmatprep.subr.bf16.mxu0 0
  %2183 = vmatpush1.bf16.msra.mxu0 0
  %2184 = vmatprep.subr.bf16.mxu0 0
  %2185 = vmatpush1.bf16.msra.mxu0 0
  %2186 = vmatprep.subr.bf16.mxu0 0
  %2187 = vmatpush1.bf16.msra.mxu0 0
  %2188 = vmatprep.subr.bf16.mxu0 0
  %2189 = vmatpush1.bf16.msra.mxu0 0
  %2190 = vmatprep.subr.bf16.mxu0 0
  %2191 = vmatpush1.bf16.msra.mxu0 0
  %2192 = vmatprep.subr.bf16.mxu0 0
  %2193 = vmatpush1.bf16.msra.mxu0 0
  %2194 = vmatprep.subr.bf16.mxu0 0
  %2195 = vmatpush1.bf16.msra.mxu0 0
  %2196 = vmatprep.subr.bf16.mxu0 0
  %2197 = vmatpush1.bf16.msra.mxu0 0
  %2198 = vmatprep.subr.bf16.mxu0 0
  %2199 = vmatpush1.bf16.msra.mxu0 0
  %2200 = vmatprep.subr.bf16.mxu0 0
  %2201 = vmatpush1.bf16.msra.mxu0 0
  %2202 = vmatprep.subr.bf16.mxu0 0
  %2203 = vmatpush1.bf16.msra.mxu0 0
  %2204 = vmatprep.subr.bf16.mxu0 0
  %2205 = vmatpush1.bf16.msra.mxu0 0
  %2206 = vmatprep.subr.bf16.mxu0 0
  %2207 = vmatpush1.bf16.msra.mxu0 0
  %2208 = vmatprep.mubr.bf16.mxu0 0
  %2209 = vmatmul.mubr.bf16.gmra.mrb[0].mxu0 %v2174
  %v2210 = vpop.f32.mrb[0].mxu0
  %v2211 = vadd.f32 %v2166, %v2210
  %v2212 = vpop.f32.mrb[0].mxu0
  %v2213 = vpop.f32.mrb[0].mxu0
  %v2214 = vadd.f32 %v2166, %v2213
  %v2215 = vpop.f32.mrb[0].mxu0
  %2216 = vdwg.mxu0
  %2217 = vst [vmem:[%s9] sm:$0xff] %v2211
  %2218 = vst [vmem:[%s9 + $0x8] sm:$0xff] %v2214
  // Predicated region
  $region38: #{xlnet_forward_core.1} parent=0 // pred_check
    _
  $region39: #{xlnet_forward_core.1} parent=0 // pred_check_branch
    %2220 = sbr.rel (0) target = $region41
  $region40: #{xlnet_forward_core.1} parent=0 // pred_region
    _
  $region41: #{xlnet_forward_core.1} parent=0 // pred_fallthru
    _
  // Predicated region
  $region42: #{xlnet_forward_core.1} parent=0 // pred_check
    _
  $region43: #{xlnet_forward_core.1} parent=0 // pred_check_branch
    %2222 = sbr.rel (0) target = $region45
  $region44: #{xlnet_forward_core.1} parent=0 // pred_region
    _
  $region45: #{xlnet_forward_core.1} parent=0 // pred_fallthru
    _

</llo_original>
